<compile_context>
chip_gen: v7x
topology: tpu7x:2x2x1
jax: 0.10.0
libtpu: 0.0.40
codegen_flags: <defaults>
</compile_context>

<pallas_src>
import functools
import math

import jax
import jax.numpy as jnp
from jax.experimental import pallas as pl
from jax.experimental.pallas import tpu as pltpu

SQRT2 = math.sqrt(2.0)
NEG_SLOPE = 0.2


def _round_up(x, m):
    return (x + m - 1) // m * m


# --------------------------- fused Pallas kernel ---------------------------

def _double_conv_kernel(z_ref, w1_ref, w2_ref, mask_ref, o_ref, tmp_ref, *,
                        mz, base, shifts1, offs2):
    """conv1(4x4,s2,p1)+SLReLU -> conv2(3x3,s1,p1)+SLReLU -> +residual, all in VMEM.

    z_ref   : (4*Cin, Lz)   space-to-depth input, flattened (Hg*Wg) spatial, zero tail
    w1_ref  : (4, Cout, 4*Cin)  per-tap conv1 weights (equalized-lr scale * sqrt2 folded)
    w2_ref  : (9, Cout, Cout)   per-tap conv2 weights (scale * sqrt2 folded)
    mask_ref: (1, Mz)  1.0 at valid (ho<Ho, wo<Wo) positions, 0.0 at border row/col
    o_ref   : (Cout, Mz)  output (channels on sublanes, flat spatial on lanes)
    tmp_ref : (Cout, Lt) VMEM scratch: conv1 activation with zero margins (= conv2 pad)
    """
    cout = o_ref.shape[0]

    # ---- conv1: 4x4/stride-2 conv == 2x2/stride-1 conv over space-to-depth channels.
    acc1 = jnp.zeros((cout, mz), jnp.float32)
    for t, s in enumerate(shifts1):
        acc1 = acc1 + jnp.dot(w1_ref[t], z_ref[:, pl.ds(s, mz)],
                              preferred_element_type=jnp.float32)
    # ScaledLeakyReLU (sqrt(2) folded into the weights; elementwise stays f32).
    act1 = jnp.where(acc1 >= 0.0, acc1, NEG_SLOPE * acc1)
    act1 = act1 * mask_ref[...]                 # zero the extra border row/col

    # ---- stash tmp with zero margins so every conv2 tap is a plain offset load.
    tmp_ref[...] = jnp.zeros(tmp_ref.shape, tmp_ref.dtype)
    tmp_ref[:, pl.ds(base, mz)] = act1.astype(tmp_ref.dtype)

    # ---- conv2 (3x3, pad 1) + ScaledLeakyReLU + residual; tmp never leaves VMEM.
    acc2 = jnp.zeros((cout, mz), jnp.float32)
    for t, off in enumerate(offs2):
        acc2 = acc2 + jnp.dot(w2_ref[t], tmp_ref[:, pl.ds(off, mz)],
                              preferred_element_type=jnp.float32)
    act2 = jnp.where(acc2 >= 0.0, acc2, NEG_SLOPE * acc2)
    o_ref[...] = (act2 + act1).astype(o_ref.dtype)


# ------------------------------ forward wrapper ------------------------------

def double_conv2d_forward(x_nchw, w1, w2, compute_dtype=jnp.bfloat16):
    """x: (N,Cin,H,W); w1: (Cout,Cin,4,4); w2: (Cout,Cout,3,3) -> (N,Cout,Ho,Wo)."""
    N, Cin, H, W = x_nchw.shape
    Cout = w1.shape[0]
    assert H >= 2 and W >= 2
    Ho = (H - 2) // 2 + 1
    Wo = (W - 2) // 2 + 1
    # Pad to 1 each side (+1 extra bottom/right if odd) so space-to-depth is exact.
    Hp, Wp = H + 2 + (H % 2), W + 2 + (W % 2)
    Hg, Wg = Hp // 2, Wp // 2                   # grid incl. border row(s)/col(s)
    Mz = Hg * Wg
    base = Wg + 1
    Lz = _round_up(Mz + Wg + 1, 128)            # conv1 max read offset + Mz
    Lt = _round_up(Mz + 2 * (Wg + 1), 128)      # conv2 max read offset + Mz

    # --- layout-only glue (XLA): pad, space-to-depth, flatten. No k*k im2col blow-up.
    xc = x_nchw.astype(compute_dtype)
    xp = jnp.pad(xc, ((0, 0), (0, 0), (1, 1 + H % 2), (1, 1 + W % 2)))
    z = xp.reshape(N, Cin, Hg, 2, Wg, 2).transpose(0, 3, 5, 1, 2, 4)  # (N,p,q,Cin,Hg,Wg)
    z = z.reshape(N, 4 * Cin, Mz)
    z = jnp.pad(z, ((0, 0), (0, 0), (0, Lz - Mz)))

    # --- weights: equalized-lr scale AND the sqrt(2) of ScaledLeakyReLU folded in.
    scale1 = SQRT2 / math.sqrt(Cin * 4 * 4)
    w1k = (w1.reshape(Cout, Cin, 2, 2, 2, 2)
             .transpose(2, 4, 0, 3, 5, 1)                  # (di, dj, o, p, q, c)
             .reshape(4, Cout, 4 * Cin) * scale1).astype(compute_dtype)
    scale2 = SQRT2 / math.sqrt(Cout * 3 * 3)
    w2k = (w2.transpose(2, 3, 0, 1).reshape(9, Cout, Cout) * scale2).astype(compute_dtype)

    # --- validity mask over the (Hg, Wg) grid (zero at the extra border row/col).
    valid = (jnp.arange(Hg) < Ho)[:, None] & (jnp.arange(Wg) < Wo)[None, :]
    mask = valid.reshape(1, Mz).astype(jnp.float32)

    shifts1 = (0, 1, Wg, Wg + 1)                            # conv1 taps (di,dj) in {0,1}^2
    offs2 = tuple((di + 1) * Wg + (dj + 1)                  # conv2 taps, offset by `base`
                  for di in (-1, 0, 1) for dj in (-1, 0, 1))

    kernel = functools.partial(_double_conv_kernel, mz=Mz, base=base,
                               shifts1=shifts1, offs2=offs2)

    # Explicit VMEM budget (capped well below v7x's 64 MiB physical VMEM).
    ic = jnp.dtype(compute_dtype).itemsize
    io = jnp.dtype(x_nchw.dtype).itemsize
    working_set = (2 * 4 * Cin * Lz * ic            # double-buffered z block
                   + 2 * Cout * Mz * io             # double-buffered output block
                   + (4 * 4 * Cin + 9 * Cout) * Cout * ic
                   + Mz * 4 + Cout * Lt * ic)       # mask + tmp scratch
    vmem_limit = int(min(max(6 * working_set, 8 << 20), 48 << 20))

    out_flat = pl.pallas_call(
        kernel,
        out_shape=jax.ShapeDtypeStruct((N, Cout, Mz), x_nchw.dtype),
        grid=(N,),
        in_specs=[
            pl.BlockSpec((None, 4 * Cin, Lz), lambda n: (n, 0, 0)),
            pl.BlockSpec((4, Cout, 4 * Cin), lambda n: (0, 0, 0)),
            pl.BlockSpec((9, Cout, Cout), lambda n: (0, 0, 0)),
            pl.BlockSpec((1, Mz), lambda n: (0, 0)),
        ],
        out_specs=pl.BlockSpec((None, Cout, Mz), lambda n: (n, 0, 0)),
        scratch_shapes=[pltpu.VMEM((Cout, Lt), compute_dtype)],
        compiler_params=pltpu.CompilerParams(
            dimension_semantics=("parallel",),      # batch across TCs (v7x megacore)
            vmem_limit_bytes=vmem_limit),
    )(z, w1k, w2k, mask)

    # Drop the border row/col of the (Hg, Wg) grid -> NCHW output, no final transpose.
    return out_flat.reshape(N, Cout, Hg, Wg)[:, :, :Ho, :Wo]


# ---------------------- pure-JAX reference (correctness) ----------------------

def _ref_forward(x, w1, w2):
    def conv(v, w, stride, pad):
        cin, k = w.shape[1], w.shape[2]
        scale = 1.0 / math.sqrt(cin * k * k)
        return jax.lax.conv_general_dilated(
            v, w * scale, (stride, stride), [(pad, pad), (pad, pad)],
            dimension_numbers=("NCHW", "OIHW", "NCHW"))

    def slrelu(v):
        return jnp.where(v >= 0, v, NEG_SLOPE * v) * SQRT2

    tmp = slrelu(conv(x, w1, 2, 1))
    return slrelu(conv(tmp, w2, 1, 1)) + tmp


if __name__ == "__main__":
    key = jax.random.PRNGKey(0)
    k_x, k_w1, k_w2 = jax.random.split(key, 3)

    N, Cin, H, W = 2, 32, 16, 16        # module defaults: source=output=32 channels
    Cout = 32

    x = jax.random.normal(k_x, (N, Cin, H, W), dtype=jnp.float32)
    w1 = jax.random.normal(k_w1, (Cout, Cin, 4, 4), dtype=jnp.float32)
    w2 = jax.random.normal(k_w2, (Cout, Cout, 3, 3), dtype=jnp.float32)

    ref = _ref_forward(x, w1, w2)

    # Exact path (f32 operands) — validates the fused algorithm itself.
    f32_fn = jax.jit(functools.partial(double_conv2d_forward, compute_dtype=jnp.float32))
    out_f32 = jax.block_until_ready(f32_fn(x, w1, w2))
    assert out_f32.shape == (N, Cout, H // 2, W // 2), out_f32.shape
    rel = float(jnp.linalg.norm(out_f32 - ref) / jnp.linalg.norm(ref))
    assert rel < 5e-3, rel

    # Fast path (bf16 operands, f32 accumulation) — default, per v6e/v7x guidance.
    out_bf16 = jax.block_until_ready(jax.jit(double_conv2d_forward)(x, w1, w2))
    assert out_bf16.shape == (N, Cout, H // 2, W // 2), out_bf16.shape
    rel = float(jnp.linalg.norm(out_bf16 - ref) / jnp.linalg.norm(ref))
    assert rel < 3e-2, rel              # bf16 operand rounding only (f32 accumulation)

    print("KERNEL_OK")
</pallas_src>

<mosaic_0001>
module attributes {stable_mosaic.version = 11 : i64} {
  func.func @_double_conv_kernel(%arg0: i32, %arg1: memref<1x128x128xf32, #tpu.memory_space<vmem>>, %arg2: memref<4x32x128xf32, #tpu.memory_space<vmem>>, %arg3: memref<9x32x32xf32, #tpu.memory_space<vmem>>, %arg4: memref<1x81xf32, #tpu.memory_space<vmem>>, %arg5: memref<1x32x81xf32, #tpu.memory_space<vmem>>, %arg6: memref<32x128xf32, #tpu.memory_space<vmem>>) attributes {dimension_semantics = [#tpu.dimension_semantics<parallel>], iteration_bounds = array<i64: 2>, scalar_prefetch = 0 : i64, scratch_operands = 1 : i64, tpu.core_type = #tpu.core_type<tc>, window_params = [{transform_indices = @transform_0, window_bounds = array<i64: 1, 128, 128>}, {pipeline_mode = #tpu.pipeline_mode<synchronous>, transform_indices = @transform_1, window_bounds = array<i64: 4, 32, 128>}, {pipeline_mode = #tpu.pipeline_mode<synchronous>, transform_indices = @transform_2, window_bounds = array<i64: 9, 32, 32>}, {pipeline_mode = #tpu.pipeline_mode<synchronous>, transform_indices = @transform_3, window_bounds = array<i64: 1, 81>}, {transform_indices = @transform_4, window_bounds = array<i64: 1, 32, 81>}]} {
    %cst = arith.constant 0.000000e+00 : f32
    %0 = vector.broadcast %cst : f32 to vector<32x81xf32>
    %c0 = arith.constant 0 : index
    %c0_0 = arith.constant 0 : index
    %c0_1 = arith.constant 0 : index
    %1 = vector.load %arg2[%c0, %c0_0, %c0_1] : memref<4x32x128xf32, #tpu.memory_space<vmem>>, vector<1x32x128xf32>
    %2 = vector.shape_cast %1 : vector<1x32x128xf32> to vector<32x128xf32>
    %c0_2 = arith.constant 0 : index
    %c0_3 = arith.constant 0 : index
    %c0_4 = arith.constant 0 : index
    %3 = vector.load %arg1[%c0_2, %c0_3, %c0_4] : memref<1x128x128xf32, #tpu.memory_space<vmem>>, vector<1x128x81xf32>
    %4 = vector.shape_cast %3 : vector<1x128x81xf32> to vector<128x81xf32>
    %cst_5 = arith.constant dense<0.000000e+00> : vector<32x81xf32>
    %5 = tpu.matmul %2, %4, %cst_5 {dimension_numbers = #tpu.dot_dimension_numbers<[1], [0], [0], [1], [0, 0, 1, 1], [], []>} : vector<32x128xf32>, vector<128x81xf32>, vector<32x81xf32> -> vector<32x81xf32>
    %6 = arith.addf %0, %5 : vector<32x81xf32>
    %c1 = arith.constant 1 : index
    %c0_6 = arith.constant 0 : index
    %c0_7 = arith.constant 0 : index
    %7 = vector.load %arg2[%c1, %c0_6, %c0_7] : memref<4x32x128xf32, #tpu.memory_space<vmem>>, vector<1x32x128xf32>
    %8 = vector.shape_cast %7 : vector<1x32x128xf32> to vector<32x128xf32>
    %c0_8 = arith.constant 0 : index
    %c0_9 = arith.constant 0 : index
    %c1_10 = arith.constant 1 : index
    %9 = vector.load %arg1[%c0_8, %c0_9, %c1_10] : memref<1x128x128xf32, #tpu.memory_space<vmem>>, vector<1x128x81xf32>
    %10 = vector.shape_cast %9 : vector<1x128x81xf32> to vector<128x81xf32>
    %cst_11 = arith.constant dense<0.000000e+00> : vector<32x81xf32>
    %11 = tpu.matmul %8, %10, %cst_11 {dimension_numbers = #tpu.dot_dimension_numbers<[1], [0], [0], [1], [0, 0, 1, 1], [], []>} : vector<32x128xf32>, vector<128x81xf32>, vector<32x81xf32> -> vector<32x81xf32>
    %12 = arith.addf %6, %11 : vector<32x81xf32>
    %c2 = arith.constant 2 : index
    %c0_12 = arith.constant 0 : index
    %c0_13 = arith.constant 0 : index
    %13 = vector.load %arg2[%c2, %c0_12, %c0_13] : memref<4x32x128xf32, #tpu.memory_space<vmem>>, vector<1x32x128xf32>
    %14 = vector.shape_cast %13 : vector<1x32x128xf32> to vector<32x128xf32>
    %c0_14 = arith.constant 0 : index
    %c0_15 = arith.constant 0 : index
    %c9 = arith.constant 9 : index
    %15 = vector.load %arg1[%c0_14, %c0_15, %c9] : memref<1x128x128xf32, #tpu.memory_space<vmem>>, vector<1x128x81xf32>
    %16 = vector.shape_cast %15 : vector<1x128x81xf32> to vector<128x81xf32>
    %cst_16 = arith.constant dense<0.000000e+00> : vector<32x81xf32>
    %17 = tpu.matmul %14, %16, %cst_16 {dimension_numbers = #tpu.dot_dimension_numbers<[1], [0], [0], [1], [0, 0, 1, 1], [], []>} : vector<32x128xf32>, vector<128x81xf32>, vector<32x81xf32> -> vector<32x81xf32>
    %18 = arith.addf %12, %17 : vector<32x81xf32>
    %c3 = arith.constant 3 : index
    %c0_17 = arith.constant 0 : index
    %c0_18 = arith.constant 0 : index
    %19 = vector.load %arg2[%c3, %c0_17, %c0_18] : memref<4x32x128xf32, #tpu.memory_space<vmem>>, vector<1x32x128xf32>
    %20 = vector.shape_cast %19 : vector<1x32x128xf32> to vector<32x128xf32>
    %c0_19 = arith.constant 0 : index
    %c0_20 = arith.constant 0 : index
    %c10 = arith.constant 10 : index
    %21 = vector.load %arg1[%c0_19, %c0_20, %c10] : memref<1x128x128xf32, #tpu.memory_space<vmem>>, vector<1x128x81xf32>
    %22 = vector.shape_cast %21 : vector<1x128x81xf32> to vector<128x81xf32>
    %cst_21 = arith.constant dense<0.000000e+00> : vector<32x81xf32>
    %23 = tpu.matmul %20, %22, %cst_21 {dimension_numbers = #tpu.dot_dimension_numbers<[1], [0], [0], [1], [0, 0, 1, 1], [], []>} : vector<32x128xf32>, vector<128x81xf32>, vector<32x81xf32> -> vector<32x81xf32>
    %24 = arith.addf %18, %23 : vector<32x81xf32>
    %cst_22 = arith.constant 0.000000e+00 : f32
    %25 = vector.broadcast %cst_22 : f32 to vector<32x81xf32>
    %26 = arith.cmpf oge, %24, %25 : vector<32x81xf32>
    %cst_23 = arith.constant 2.000000e-01 : f32
    %27 = vector.broadcast %cst_23 : f32 to vector<32x81xf32>
    %28 = arith.mulf %27, %24 : vector<32x81xf32>
    %29 = arith.select %26, %24, %28 : vector<32x81xi1>, vector<32x81xf32>
    %c0_24 = arith.constant 0 : index
    %c0_25 = arith.constant 0 : index
    %30 = vector.load %arg4[%c0_24, %c0_25] : memref<1x81xf32, #tpu.memory_space<vmem>>, vector<1x81xf32>
    %31 = vector.broadcast %30 : vector<1x81xf32> to vector<32x81xf32>
    %32 = arith.mulf %29, %31 : vector<32x81xf32>
    %cst_26 = arith.constant 0.000000e+00 : f32
    %33 = vector.broadcast %cst_26 : f32 to vector<32x128xf32>
    %c0_27 = arith.constant 0 : index
    %c0_28 = arith.constant 0 : index
    %34 = vector.load %arg6[%c0_27, %c0_28] : memref<32x128xf32, #tpu.memory_space<vmem>>, vector<32x128xf32>
    tpu.vector_store %arg6[%c0_27, %c0_28], %33 {strides = array<i32>} : memref<32x128xf32, #tpu.memory_space<vmem>>, vector<32x128xf32>,
    %c0_29 = arith.constant 0 : index
    %c10_30 = arith.constant 10 : index
    %35 = vector.load %arg6[%c0_29, %c10_30] : memref<32x128xf32, #tpu.memory_space<vmem>>, vector<32x81xf32>
    tpu.vector_store %arg6[%c0_29, %c10_30], %32 {strides = array<i32>} : memref<32x128xf32, #tpu.memory_space<vmem>>, vector<32x81xf32>,
    %cst_31 = arith.constant 0.000000e+00 : f32
    %36 = vector.broadcast %cst_31 : f32 to vector<32x81xf32>
    %c0_32 = arith.constant 0 : index
    %c0_33 = arith.constant 0 : index
    %c0_34 = arith.constant 0 : index
    %37 = vector.load %arg3[%c0_32, %c0_33, %c0_34] : memref<9x32x32xf32, #tpu.memory_space<vmem>>, vector<1x32x32xf32>
    %38 = vector.shape_cast %37 : vector<1x32x32xf32> to vector<32x32xf32>
    %c0_35 = arith.constant 0 : index
    %c0_36 = arith.constant 0 : index
    %39 = vector.load %arg6[%c0_35, %c0_36] : memref<32x128xf32, #tpu.memory_space<vmem>>, vector<32x81xf32>
    %cst_37 = arith.constant dense<0.000000e+00> : vector<32x81xf32>
    %40 = tpu.matmul %38, %39, %cst_37 {dimension_numbers = #tpu.dot_dimension_numbers<[1], [0], [0], [1], [0, 0, 1, 1], [], []>} : vector<32x32xf32>, vector<32x81xf32>, vector<32x81xf32> -> vector<32x81xf32>
    %41 = arith.addf %36, %40 : vector<32x81xf32>
    %c1_38 = arith.constant 1 : index
    %c0_39 = arith.constant 0 : index
    %c0_40 = arith.constant 0 : index
    %42 = vector.load %arg3[%c1_38, %c0_39, %c0_40] : memref<9x32x32xf32, #tpu.memory_space<vmem>>, vector<1x32x32xf32>
    %43 = vector.shape_cast %42 : vector<1x32x32xf32> to vector<32x32xf32>
    %c0_41 = arith.constant 0 : index
    %c1_42 = arith.constant 1 : index
    %44 = vector.load %arg6[%c0_41, %c1_42] : memref<32x128xf32, #tpu.memory_space<vmem>>, vector<32x81xf32>
    %cst_43 = arith.constant dense<0.000000e+00> : vector<32x81xf32>
    %45 = tpu.matmul %43, %44, %cst_43 {dimension_numbers = #tpu.dot_dimension_numbers<[1], [0], [0], [1], [0, 0, 1, 1], [], []>} : vector<32x32xf32>, vector<32x81xf32>, vector<32x81xf32> -> vector<32x81xf32>
    %46 = arith.addf %41, %45 : vector<32x81xf32>
    %c2_44 = arith.constant 2 : index
    %c0_45 = arith.constant 0 : index
    %c0_46 = arith.constant 0 : index
    %47 = vector.load %arg3[%c2_44, %c0_45, %c0_46] : memref<9x32x32xf32, #tpu.memory_space<vmem>>, vector<1x32x32xf32>
    %48 = vector.shape_cast %47 : vector<1x32x32xf32> to vector<32x32xf32>
    %c0_47 = arith.constant 0 : index
    %c2_48 = arith.constant 2 : index
    %49 = vector.load %arg6[%c0_47, %c2_48] : memref<32x128xf32, #tpu.memory_space<vmem>>, vector<32x81xf32>
    %cst_49 = arith.constant dense<0.000000e+00> : vector<32x81xf32>
    %50 = tpu.matmul %48, %49, %cst_49 {dimension_numbers = #tpu.dot_dimension_numbers<[1], [0], [0], [1], [0, 0, 1, 1], [], []>} : vector<32x32xf32>, vector<32x81xf32>, vector<32x81xf32> -> vector<32x81xf32>
    %51 = arith.addf %46, %50 : vector<32x81xf32>
    %c3_50 = arith.constant 3 : index
    %c0_51 = arith.constant 0 : index
    %c0_52 = arith.constant 0 : index
    %52 = vector.load %arg3[%c3_50, %c0_51, %c0_52] : memref<9x32x32xf32, #tpu.memory_space<vmem>>, vector<1x32x32xf32>
    %53 = vector.shape_cast %52 : vector<1x32x32xf32> to vector<32x32xf32>
    %c0_53 = arith.constant 0 : index
    %c9_54 = arith.constant 9 : index
    %54 = vector.load %arg6[%c0_53, %c9_54] : memref<32x128xf32, #tpu.memory_space<vmem>>, vector<32x81xf32>
    %cst_55 = arith.constant dense<0.000000e+00> : vector<32x81xf32>
    %55 = tpu.matmul %53, %54, %cst_55 {dimension_numbers = #tpu.dot_dimension_numbers<[1], [0], [0], [1], [0, 0, 1, 1], [], []>} : vector<32x32xf32>, vector<32x81xf32>, vector<32x81xf32> -> vector<32x81xf32>
    %56 = arith.addf %51, %55 : vector<32x81xf32>
    %c4 = arith.constant 4 : index
    %c0_56 = arith.constant 0 : index
    %c0_57 = arith.constant 0 : index
    %57 = vector.load %arg3[%c4, %c0_56, %c0_57] : memref<9x32x32xf32, #tpu.memory_space<vmem>>, vector<1x32x32xf32>
    %58 = vector.shape_cast %57 : vector<1x32x32xf32> to vector<32x32xf32>
    %c0_58 = arith.constant 0 : index
    %c10_59 = arith.constant 10 : index
    %59 = vector.load %arg6[%c0_58, %c10_59] : memref<32x128xf32, #tpu.memory_space<vmem>>, vector<32x81xf32>
    %cst_60 = arith.constant dense<0.000000e+00> : vector<32x81xf32>
    %60 = tpu.matmul %58, %59, %cst_60 {dimension_numbers = #tpu.dot_dimension_numbers<[1], [0], [0], [1], [0, 0, 1, 1], [], []>} : vector<32x32xf32>, vector<32x81xf32>, vector<32x81xf32> -> vector<32x81xf32>
    %61 = arith.addf %56, %60 : vector<32x81xf32>
    %c5 = arith.constant 5 : index
    %c0_61 = arith.constant 0 : index
    %c0_62 = arith.constant 0 : index
    %62 = vector.load %arg3[%c5, %c0_61, %c0_62] : memref<9x32x32xf32, #tpu.memory_space<vmem>>, vector<1x32x32xf32>
    %63 = vector.shape_cast %62 : vector<1x32x32xf32> to vector<32x32xf32>
    %c0_63 = arith.constant 0 : index
    %c11 = arith.constant 11 : index
    %64 = vector.load %arg6[%c0_63, %c11] : memref<32x128xf32, #tpu.memory_space<vmem>>, vector<32x81xf32>
    %cst_64 = arith.constant dense<0.000000e+00> : vector<32x81xf32>
    %65 = tpu.matmul %63, %64, %cst_64 {dimension_numbers = #tpu.dot_dimension_numbers<[1], [0], [0], [1], [0, 0, 1, 1], [], []>} : vector<32x32xf32>, vector<32x81xf32>, vector<32x81xf32> -> vector<32x81xf32>
    %66 = arith.addf %61, %65 : vector<32x81xf32>
    %c6 = arith.constant 6 : index
    %c0_65 = arith.constant 0 : index
    %c0_66 = arith.constant 0 : index
    %67 = vector.load %arg3[%c6, %c0_65, %c0_66] : memref<9x32x32xf32, #tpu.memory_space<vmem>>, vector<1x32x32xf32>
    %68 = vector.shape_cast %67 : vector<1x32x32xf32> to vector<32x32xf32>
    %c0_67 = arith.constant 0 : index
    %c18 = arith.constant 18 : index
    %69 = vector.load %arg6[%c0_67, %c18] : memref<32x128xf32, #tpu.memory_space<vmem>>, vector<32x81xf32>
    %cst_68 = arith.constant dense<0.000000e+00> : vector<32x81xf32>
    %70 = tpu.matmul %68, %69, %cst_68 {dimension_numbers = #tpu.dot_dimension_numbers<[1], [0], [0], [1], [0, 0, 1, 1], [], []>} : vector<32x32xf32>, vector<32x81xf32>, vector<32x81xf32> -> vector<32x81xf32>
    %71 = arith.addf %66, %70 : vector<32x81xf32>
    %c7 = arith.constant 7 : index
    %c0_69 = arith.constant 0 : index
    %c0_70 = arith.constant 0 : index
    %72 = vector.load %arg3[%c7, %c0_69, %c0_70] : memref<9x32x32xf32, #tpu.memory_space<vmem>>, vector<1x32x32xf32>
    %73 = vector.shape_cast %72 : vector<1x32x32xf32> to vector<32x32xf32>
    %c0_71 = arith.constant 0 : index
    %c19 = arith.constant 19 : index
    %74 = vector.load %arg6[%c0_71, %c19] : memref<32x128xf32, #tpu.memory_space<vmem>>, vector<32x81xf32>
    %cst_72 = arith.constant dense<0.000000e+00> : vector<32x81xf32>
    %75 = tpu.matmul %73, %74, %cst_72 {dimension_numbers = #tpu.dot_dimension_numbers<[1], [0], [0], [1], [0, 0, 1, 1], [], []>} : vector<32x32xf32>, vector<32x81xf32>, vector<32x81xf32> -> vector<32x81xf32>
    %76 = arith.addf %71, %75 : vector<32x81xf32>
    %c8 = arith.constant 8 : index
    %c0_73 = arith.constant 0 : index
    %c0_74 = arith.constant 0 : index
    %77 = vector.load %arg3[%c8, %c0_73, %c0_74] : memref<9x32x32xf32, #tpu.memory_space<vmem>>, vector<1x32x32xf32>
    %78 = vector.shape_cast %77 : vector<1x32x32xf32> to vector<32x32xf32>
    %c0_75 = arith.constant 0 : index
    %c20 = arith.constant 20 : index
    %79 = vector.load %arg6[%c0_75, %c20] : memref<32x128xf32, #tpu.memory_space<vmem>>, vector<32x81xf32>
    %cst_76 = arith.constant dense<0.000000e+00> : vector<32x81xf32>
    %80 = tpu.matmul %78, %79, %cst_76 {dimension_numbers = #tpu.dot_dimension_numbers<[1], [0], [0], [1], [0, 0, 1, 1], [], []>} : vector<32x32xf32>, vector<32x81xf32>, vector<32x81xf32> -> vector<32x81xf32>
    %81 = arith.addf %76, %80 : vector<32x81xf32>
    %cst_77 = arith.constant 0.000000e+00 : f32
    %82 = vector.broadcast %cst_77 : f32 to vector<32x81xf32>
    %83 = arith.cmpf oge, %81, %82 : vector<32x81xf32>
    %cst_78 = arith.constant 2.000000e-01 : f32
    %84 = vector.broadcast %cst_78 : f32 to vector<32x81xf32>
    %85 = arith.mulf %84, %81 : vector<32x81xf32>
    %86 = arith.select %83, %81, %85 : vector<32x81xi1>, vector<32x81xf32>
    %87 = arith.addf %86, %32 : vector<32x81xf32>
    %c0_79 = arith.constant 0 : index
    %c0_80 = arith.constant 0 : index
    %c0_81 = arith.constant 0 : index
    %88 = vector.load %arg5[%c0_79, %c0_80, %c0_81] : memref<1x32x81xf32, #tpu.memory_space<vmem>>, vector<1x32x81xf32>
    %89 = vector.shape_cast %88 : vector<1x32x81xf32> to vector<32x81xf32>
    %90 = vector.shape_cast %87 : vector<32x81xf32> to vector<1x32x81xf32>
    tpu.vector_store %arg5[%c0_79, %c0_80, %c0_81], %90 {strides = array<i32>} : memref<1x32x81xf32, #tpu.memory_space<vmem>>, vector<1x32x81xf32>,
    return
  }
  func.func @transform_0(%arg0: i32) -> (i32, i32, i32) {
    %c0_i32 = arith.constant 0 : i32
    %c0_i32_0 = arith.constant 0 : i32
    %c0_i32_1 = arith.constant 0 : i32
    return %arg0, %c0_i32, %c0_i32_0 : i32, i32, i32
  }
  func.func @transform_1(%arg0: i32) -> (i32, i32, i32) {
    %c0_i32 = arith.constant 0 : i32
    %c0_i32_0 = arith.constant 0 : i32
    %c0_i32_1 = arith.constant 0 : i32
    %c0_i32_2 = arith.constant 0 : i32
    return %c0_i32, %c0_i32_0, %c0_i32_1 : i32, i32, i32
  }
  func.func @transform_2(%arg0: i32) -> (i32, i32, i32) {
    %c0_i32 = arith.constant 0 : i32
    %c0_i32_0 = arith.constant 0 : i32
    %c0_i32_1 = arith.constant 0 : i32
    %c0_i32_2 = arith.constant 0 : i32
    return %c0_i32, %c0_i32_0, %c0_i32_1 : i32, i32, i32
  }
  func.func @transform_3(%arg0: i32) -> (i32, i32) {
    %c0_i32 = arith.constant 0 : i32
    %c0_i32_0 = arith.constant 0 : i32
    %c0_i32_1 = arith.constant 0 : i32
    return %c0_i32, %c0_i32_0 : i32, i32
  }
  func.func @transform_4(%arg0: i32) -> (i32, i32, i32) {
    %c0_i32 = arith.constant 0 : i32
    %c0_i32_0 = arith.constant 0 : i32
    %c0_i32_1 = arith.constant 0 : i32
    return %arg0, %c0_i32, %c0_i32_0 : i32, i32, i32
  }
}

</mosaic_0001>

<llo_original>
// kernel: double_conv2d_forward.1
$region0: #{double_conv2d_forward.1}
  #allocation0 [shape = 'u32[]', space=smem, size = 0x4, offset = 0x4, fixed_abs, tag = 'smem constant byte address 0x4 - core index']
  #allocation1 [shape = 'u32[144,128]{1,0:T(1,128)}', space=vmem, size = 0x12000, scoped, tag = 'internal scratch']
  #allocation2 [shape = 'f32[32,128]{1,0:T(8,128)}', space=vmem, size = 0x4000, scoped, tag = 'scratch operand']
  %s0 = inlined_call_operand.vmem [shape: f32[2,128,128], index: 0, kind: input, shape index: {}]
  %s1 = inlined_call_operand.vmem [shape: f32[4,32,128], index: 1, kind: input, shape index: {}]
  %s2 = inlined_call_operand.vmem [shape: f32[9,32,32], index: 2, kind: input, shape index: {}]
  %s3 = inlined_call_operand.vmem [shape: f32[1,81], index: 3, kind: input, shape index: {}]
  %s4 = inlined_call_operand.vmem [shape: f32[2,32,81], index: 4, kind: output, shape index: {}]
  %s5 = sld [smem:[#allocation0]]
  $region49: #{double_conv2d_forward.1} parent=0
    _
  %s7 = ssub.s32 1, %s5
  %s8 = scalar_select 0, %s7, %s5
  loop: start=0, step=1, limit=4
  $region2: #{double_conv2d_forward.1} parent=0 // loop_pre_header
    _
  $region3: #{double_conv2d_forward.1} parent=0 // loop_header
    %s10 = sphi 0, %s14
    %p11 = scmp.ge.s32.totalorder %s10, 4
    %s20 = sphi 0, %s22
    %s23 = sphi 0, %s20
    %s24 = sphi 0, %s23
    %s40 = sphi 0, %s24
    %s44 = sphi 0, %s44
    %s46 = sphi 0, %s44
    %s47 = sphi 0, %s46
    %s61 = sphi 0, %s47
    %s65 = sphi 0, %s65
    %s67 = sphi 0, %s65
    %s68 = sphi 0, %s67
    %s82 = sphi 0, %s68
    %s86 = sphi 0, %s86
    %s88 = sphi 0, %s86
    %s89 = sphi 0, %s88
    %s103 = sphi 0, %s89
    %s109 = sphi 0, %s111
    %s112 = sphi 0, %s109
    %s113 = sphi 0, %s112
    %s129 = sphi 0, %s113
  $region4: #{double_conv2d_forward.1} parent=0 // loop_header_branch
    %13 = sbr.rel (%p11) target = $region8
  $region5: #{double_conv2d_forward.1} parent=0 // loop_body
    %s15 = ssub.s32 %s10, 1
    %s16 = ssub.s32 %s10, 2
    %s17 = sadd.s32 %s10, 1
    %s18 = ssub.s32 %s10, %s17
    %p19 = scmp.eq.s32.totalorder %s18, 0
    %s21 = sadd.s32 %s20, 1
    %s22 = scalar_select %p19, %s20, %s21
    %p25 = pneg %p19
    %p26 = scmp.eq.s32.totalorder %s10, 1
    %p27 = por %p25, %p26
    %p28 = scmp.ne.s32.totalorder %s20, %s23
    %p29 = scmp.eq.s32.totalorder %s10, 0
    %p30 = por %p28, %p29
    %p31 = scmp.ne.s32.totalorder %s20, %s23
    %p32 = scmp.eq.s32.totalorder %s15, 1
    %p33 = por %p31, %p32
    %p34 = scmp.ne.s32.totalorder %s23, %s24
    %p35 = scmp.eq.s32.totalorder %s15, 0
    %p36 = por %p34, %p35
    %p37 = scmp.ne.s32.totalorder %s23, %s24
    %p38 = scmp.eq.s32.totalorder %s16, 1
    %p39 = por %p37, %p38
    %p41 = scmp.ne.s32.totalorder %s24, %s40
    %p42 = scmp.eq.s32.totalorder %s16, 0
    %p43 = por %p41, %p42
    %s45 = sadd.s32 %s44, 1
    %p48 = scmp.eq.s32.totalorder %s10, 1
    %p49 = scmp.ne.s32.totalorder %s44, %s46
    %p50 = scmp.eq.s32.totalorder %s10, 0
    %p51 = por %p49, %p50
    %p52 = scmp.ne.s32.totalorder %s44, %s46
    %p53 = scmp.eq.s32.totalorder %s15, 1
    %p54 = por %p52, %p53
    %p55 = scmp.ne.s32.totalorder %s46, %s47
    %p56 = scmp.eq.s32.totalorder %s15, 0
    %p57 = por %p55, %p56
    %p58 = scmp.ne.s32.totalorder %s46, %s47
    %p59 = scmp.eq.s32.totalorder %s16, 1
    %p60 = por %p58, %p59
    %p62 = scmp.ne.s32.totalorder %s47, %s61
    %p63 = scmp.eq.s32.totalorder %s16, 0
    %p64 = por %p62, %p63
    %s66 = sadd.s32 %s65, 1
    %p69 = scmp.eq.s32.totalorder %s10, 1
    %p70 = scmp.ne.s32.totalorder %s65, %s67
    %p71 = scmp.eq.s32.totalorder %s10, 0
    %p72 = por %p70, %p71
    %p73 = scmp.ne.s32.totalorder %s65, %s67
    %p74 = scmp.eq.s32.totalorder %s15, 1
    %p75 = por %p73, %p74
    %p76 = scmp.ne.s32.totalorder %s67, %s68
    %p77 = scmp.eq.s32.totalorder %s15, 0
    %p78 = por %p76, %p77
    %p79 = scmp.ne.s32.totalorder %s67, %s68
    %p80 = scmp.eq.s32.totalorder %s16, 1
    %p81 = por %p79, %p80
    %p83 = scmp.ne.s32.totalorder %s68, %s82
    %p84 = scmp.eq.s32.totalorder %s16, 0
    %p85 = por %p83, %p84
    %s87 = sadd.s32 %s86, 1
    %p90 = scmp.eq.s32.totalorder %s10, 1
    %p91 = scmp.ne.s32.totalorder %s86, %s88
    %p92 = scmp.eq.s32.totalorder %s10, 0
    %p93 = por %p91, %p92
    %p94 = scmp.ne.s32.totalorder %s86, %s88
    %p95 = scmp.eq.s32.totalorder %s15, 1
    %p96 = por %p94, %p95
    %p97 = scmp.ne.s32.totalorder %s88, %s89
    %p98 = scmp.eq.s32.totalorder %s15, 0
    %p99 = por %p97, %p98
    %p100 = scmp.ne.s32.totalorder %s88, %s89
    %p101 = scmp.eq.s32.totalorder %s16, 1
    %p102 = por %p100, %p101
    %p104 = scmp.ne.s32.totalorder %s89, %s103
    %p105 = scmp.eq.s32.totalorder %s16, 0
    %p106 = por %p104, %p105
    %s107 = ssub.s32 %s10, %s17
    %p108 = scmp.eq.s32.totalorder %s107, 0
    %s110 = sadd.s32 %s109, 1
    %s111 = scalar_select %p108, %s109, %s110
    %p114 = pneg %p108
    %p115 = scmp.eq.s32.totalorder %s10, 1
    %p116 = por %p114, %p115
    %p117 = scmp.ne.s32.totalorder %s109, %s112
    %p118 = scmp.eq.s32.totalorder %s10, 0
    %p119 = por %p117, %p118
    %p120 = scmp.ne.s32.totalorder %s109, %s112
    %p121 = scmp.eq.s32.totalorder %s15, 1
    %p122 = por %p120, %p121
    %p123 = scmp.ne.s32.totalorder %s112, %s113
    %p124 = scmp.eq.s32.totalorder %s15, 0
    %p125 = por %p123, %p124
    %p126 = scmp.ne.s32.totalorder %s112, %s113
    %p127 = scmp.eq.s32.totalorder %s16, 1
    %p128 = por %p126, %p127
    %p130 = scmp.ne.s32.totalorder %s113, %s129
    %p131 = scmp.eq.s32.totalorder %s16, 0
    %p132 = por %p130, %p131
    %p133 = scmp.le.s32.totalorder 1, %s10
    %p134 = scmp.lt.s32.totalorder %s10, 3
    %p135 = pnand %p133, %p134
    %p136 = pneg %p135
    // Predicated region
    $region9: #{double_conv2d_forward.1} parent=5 // pred_check
      _
    $region10: #{double_conv2d_forward.1} parent=5 // pred_check_branch
      %138 = sbr.rel (%p135) target = $region12
    $region11: #{double_conv2d_forward.1} parent=5 // pred_region
      %s139 = ssub.s32 %s10, 1
      // Predicated region
      $region13: #{double_conv2d_forward.1} parent=11 // pred_check
        %p140 = pneg %p57
      $region14: #{double_conv2d_forward.1} parent=11 // pred_check_branch
        %142 = sbr.rel (%p140) target = $region16
      $region15: #{double_conv2d_forward.1} parent=11 // pred_region
        _
      $region16: #{double_conv2d_forward.1} parent=11 // pred_fallthru
        _
      // Predicated region
      $region17: #{double_conv2d_forward.1} parent=11 // pred_check
        %p143 = pneg %p78
      $region18: #{double_conv2d_forward.1} parent=11 // pred_check_branch
        %145 = sbr.rel (%p143) target = $region20
      $region19: #{double_conv2d_forward.1} parent=11 // pred_region
        _
      $region20: #{double_conv2d_forward.1} parent=11 // pred_fallthru
        _
      // Predicated region
      $region21: #{double_conv2d_forward.1} parent=11 // pred_check
        %p146 = pneg %p99
      $region22: #{double_conv2d_forward.1} parent=11 // pred_check_branch
        %148 = sbr.rel (%p146) target = $region24
      $region23: #{double_conv2d_forward.1} parent=11 // pred_region
        _
      $region24: #{double_conv2d_forward.1} parent=11 // pred_fallthru
        _
    $region12: #{double_conv2d_forward.1} parent=5 // pred_fallthru
      _
    %p149 = scmp.lt.s32.totalorder %s10, 2
    // Predicated region
    $region25: #{double_conv2d_forward.1} parent=5 // pred_check
      %p150 = pneg %p149
    $region26: #{double_conv2d_forward.1} parent=5 // pred_check_branch
      %152 = sbr.rel (%p150) target = $region28
    $region27: #{double_conv2d_forward.1} parent=5 // pred_region
      // Predicated region
      $region29: #{double_conv2d_forward.1} parent=27 // pred_check
        %p153 = pneg %p30
      $region30: #{double_conv2d_forward.1} parent=27 // pred_check_branch
        %155 = sbr.rel (%p153) target = $region32
      $region31: #{double_conv2d_forward.1} parent=27 // pred_region
        %p156 = scmp.lt.s32.totalorder %s10, 1
        %s157 = scalar_select %p156, %s10, 1
        %s158 = smul.addr %s157, 16
        %s159 = smul.addr %s158, 8
        %s160 = scalar_lea.vmem %s0, %s159
      $region32: #{double_conv2d_forward.1} parent=27 // pred_fallthru
        _
    $region28: #{double_conv2d_forward.1} parent=5 // pred_fallthru
      _
    %p161 = scmp.le.s32.totalorder 1, %s10
    %p162 = scmp.lt.s32.totalorder %s10, 3
    %p163 = pnand %p161, %p162
    %p164 = pneg %p163
    // Predicated region
    $region33: #{double_conv2d_forward.1} parent=5 // pred_check
      _
    $region34: #{double_conv2d_forward.1} parent=5 // pred_check_branch
      %166 = sbr.rel (%p163) target = $region36
    $region35: #{double_conv2d_forward.1} parent=5 // pred_region
      %s167 = ssub.s32 %s10, 1
      %p168 = scmp.lt.s32.totalorder %s15, 1
      %s169 = scalar_select %p168, %s15, 1
      %s170 = smul.addr %s169, 16
      %s171 = smul.addr %s170, 8
      %s172 = scalar_lea.vmem %s0, %s171
      %p173 = pneg %p36
      %p174 = pneg %p33
      %p175 = pneg %p57
      %p176 = pneg %p54
      %p177 = pneg %p78
      %p178 = pneg %p75
      %p179 = pneg %p99
      %p180 = pneg %p96
      %p181 = pneg %p125
      %p182 = pneg %p122
      %p183 = scmp.lt.s32.totalorder %s15, 1
      %s184 = scalar_select %p183, %s15, 1
      %s185 = smul.addr %s184, 4
      %s186 = smul.addr %s185, 8
      %s187 = scalar_lea.vmem %s4, %s186
      %p188 = scmp.lt.s32.totalorder %s15, 1
      %s189 = scalar_select %p188, %s15, 1
      %s190 = smul.addr %s189, 16
      %s191 = smul.addr %s190, 8
      %s192 = scalar_lea.vmem %s0, %s191
      %p193 = scmp.lt.s32.totalorder %s15, 1
      %s194 = scalar_select %p193, %s15, 1
      %s195 = smul.addr %s194, 4
      %s196 = smul.addr %s195, 8
      %s197 = scalar_lea.vmem %s4, %s196
      %v198 = vld [vmem:[%s1] sm:$0xff]
      %v199 = vld [vmem:[%s1 + $0x8] sm:$0xff]
      %v200 = vld [vmem:[%s1 + $0x10] sm:$0xff]
      %v201 = vld [vmem:[%s1 + $0x18] sm:$0xff]
      %v202 = vld [vmem:[%s192] sm:$0xff]
      %v203 = vld [vmem:[%s192 + $0x8] sm:$0xff]
      %v204 = vld [vmem:[%s192 + $0x10] sm:$0xff]
      %v205 = vld [vmem:[%s192 + $0x18] sm:$0xff]
      %v206 = vld [vmem:[%s192 + $0x20] sm:$0xff]
      %v207 = vld [vmem:[%s192 + $0x28] sm:$0xff]
      %v208 = vld [vmem:[%s192 + $0x30] sm:$0xff]
      %v209 = vld [vmem:[%s192 + $0x38] sm:$0xff]
      %v210 = vld [vmem:[%s192 + $0x40] sm:$0xff]
      %v211 = vld [vmem:[%s192 + $0x48] sm:$0xff]
      %v212 = vld [vmem:[%s192 + $0x50] sm:$0xff]
      %v213 = vld [vmem:[%s192 + $0x58] sm:$0xff]
      %v214 = vld [vmem:[%s192 + $0x60] sm:$0xff]
      %v215 = vld [vmem:[%s192 + $0x68] sm:$0xff]
      %v216 = vld [vmem:[%s192 + $0x70] sm:$0xff]
      %v217 = vld [vmem:[%s192 + $0x78] sm:$0xff]
      %s218 = scalar_lea.vmem %s1, 32
      %v219 = vld [vmem:[%s218] sm:$0xff]
      %v220 = vld [vmem:[%s218 + $0x8] sm:$0xff]
      %v221 = vld [vmem:[%s218 + $0x10] sm:$0xff]
      %v222 = vld [vmem:[%s218 + $0x18] sm:$0xff]
      %239 = vrot.lane.b32.xlu0 %v202, 127
      %v240 = vpop.permute.xlu0 %239
      %241 = vrot.lane.b32.xlu0 %v203, 127
      %v242 = vpop.permute.xlu0 %241
      %243 = vrot.lane.b32.xlu0 %v204, 127
      %v244 = vpop.permute.xlu0 %243
      %245 = vrot.lane.b32.xlu0 %v205, 127
      %v246 = vpop.permute.xlu0 %245
      %247 = vrot.lane.b32.xlu0 %v206, 127
      %v248 = vpop.permute.xlu0 %247
      %249 = vrot.lane.b32.xlu0 %v207, 127
      %v250 = vpop.permute.xlu0 %249
      %251 = vrot.lane.b32.xlu0 %v208, 127
      %v252 = vpop.permute.xlu0 %251
      %253 = vrot.lane.b32.xlu0 %v209, 127
      %v254 = vpop.permute.xlu0 %253
      %255 = vrot.lane.b32.xlu0 %v210, 127
      %v256 = vpop.permute.xlu0 %255
      %257 = vrot.lane.b32.xlu0 %v211, 127
      %v258 = vpop.permute.xlu0 %257
      %259 = vrot.lane.b32.xlu0 %v212, 127
      %v260 = vpop.permute.xlu0 %259
      %261 = vrot.lane.b32.xlu0 %v213, 127
      %v262 = vpop.permute.xlu0 %261
      %263 = vrot.lane.b32.xlu0 %v214, 127
      %v264 = vpop.permute.xlu0 %263
      %265 = vrot.lane.b32.xlu0 %v215, 127
      %v266 = vpop.permute.xlu0 %265
      %267 = vrot.lane.b32.xlu0 %v216, 127
      %v268 = vpop.permute.xlu0 %267
      %269 = vrot.lane.b32.xlu0 %v217, 127
      %v270 = vpop.permute.xlu0 %269
      %287 = vmatprep.subr.mxu0 0.0
      %288 = vmatpush1.msra.mxu0 %v240
      %289 = vmatprep.subr.mxu0 0.0
      %290 = vmatpush1.msra.mxu0 %v242
      %291 = vmatprep.subr.mxu0 0.0
      %292 = vmatpush1.msra.mxu0 %v244
      %293 = vmatprep.subr.mxu0 0.0
      %294 = vmatpush1.msra.mxu0 %v246
      %295 = vmatprep.subr.mxu0 0.0
      %296 = vmatpush1.msra.mxu0 %v248
      %297 = vmatprep.subr.mxu0 0.0
      %298 = vmatpush1.msra.mxu0 %v250
      %299 = vmatprep.subr.mxu0 0.0
      %300 = vmatpush1.msra.mxu0 %v252
      %301 = vmatprep.subr.mxu0 0.0
      %302 = vmatpush1.msra.mxu0 %v254
      %303 = vmatprep.subr.mxu0 0.0
      %304 = vmatpush1.msra.mxu0 %v256
      %305 = vmatprep.subr.mxu0 0.0
      %306 = vmatpush1.msra.mxu0 %v258
      %307 = vmatprep.subr.mxu0 0.0
      %308 = vmatpush1.msra.mxu0 %v260
      %309 = vmatprep.subr.mxu0 0.0
      %310 = vmatpush1.msra.mxu0 %v262
      %311 = vmatprep.subr.mxu0 0.0
      %312 = vmatpush1.msra.mxu0 %v264
      %313 = vmatprep.subr.mxu0 0.0
      %314 = vmatpush1.msra.mxu0 %v266
      %315 = vmatprep.subr.mxu0 0.0
      %316 = vmatpush1.msra.mxu0 %v268
      %317 = vmatprep.subr.mxu0 0.0
      %318 = vmatpush1.msra.mxu0 %v270
      %319 = vmatprep.subr.mxu0 0.0
      %320 = vmatpush1.msra.mxu0 0.0
      %321 = vmatprep.subr.mxu0 0.0
      %322 = vmatpush1.msra.mxu0 0.0
      %323 = vmatprep.subr.mxu0 0.0
      %324 = vmatpush1.msra.mxu0 0.0
      %325 = vmatprep.subr.mxu0 0.0
      %326 = vmatpush1.msra.mxu0 0.0
      %327 = vmatprep.subr.mxu0 0.0
      %328 = vmatpush1.msra.mxu0 0.0
      %329 = vmatprep.subr.mxu0 0.0
      %330 = vmatpush1.msra.mxu0 0.0
      %331 = vmatprep.subr.mxu0 0.0
      %332 = vmatpush1.msra.mxu0 0.0
      %333 = vmatprep.subr.mxu0 0.0
      %334 = vmatpush1.msra.mxu0 0.0
      %335 = vmatprep.subr.mxu0 0.0
      %336 = vmatpush1.msra.mxu0 0.0
      %337 = vmatprep.subr.mxu0 0.0
      %338 = vmatpush1.msra.mxu0 0.0
      %339 = vmatprep.subr.mxu0 0.0
      %340 = vmatpush1.msra.mxu0 0.0
      %341 = vmatprep.subr.mxu0 0.0
      %342 = vmatpush1.msra.mxu0 0.0
      %343 = vmatprep.subr.mxu0 0.0
      %344 = vmatpush1.msra.mxu0 0.0
      %345 = vmatprep.subr.mxu0 0.0
      %346 = vmatpush1.msra.mxu0 0.0
      %347 = vmatprep.subr.mxu0 0.0
      %348 = vmatpush1.msra.mxu0 0.0
      %349 = vmatprep.subr.mxu0 0.0
      %350 = vmatpush1.msra.mxu0 0.0
      %351 = vmatprep.mubr.f32.mxu0 0.0
      %352 = vmatmul.mubr.f32.gmra.mrb[0].mxu0 %v219
      %v353 = vpop.f32.mrb[0].mxu0
      %v354 = vadd.f32 0.0, %v353
      %v355 = vpop.f32.mrb[0].mxu0
      %356 = vmatprep.mubr.f32.mxu0 0.0
      %357 = vmatmul.mubr.f32.gmra.mrb[0].mxu0 %v220
      %v358 = vpop.f32.mrb[0].mxu0
      %v359 = vadd.f32 0.0, %v358
      %v360 = vpop.f32.mrb[0].mxu0
      %361 = vmatprep.mubr.f32.mxu0 0.0
      %362 = vmatmul.mubr.f32.gmra.mrb[0].mxu0 %v221
      %v363 = vpop.f32.mrb[0].mxu0
      %v364 = vadd.f32 0.0, %v363
      %v365 = vpop.f32.mrb[0].mxu0
      %366 = vmatprep.mubr.f32.mxu0 0.0
      %367 = vmatmul.mubr.f32.gmra.mrb[0].mxu0 %v222
      %v368 = vpop.f32.mrb[0].mxu0
      %v369 = vadd.f32 0.0, %v368
      %v370 = vpop.f32.mrb[0].mxu0
      %371 = vdwg.mxu0
      %372 = vmatprep.subr.mxu0 0.0
      %373 = vmatpush1.msra.mxu0 %v202
      %374 = vmatprep.subr.mxu0 0.0
      %375 = vmatpush1.msra.mxu0 %v203
      %376 = vmatprep.subr.mxu0 0.0
      %377 = vmatpush1.msra.mxu0 %v204
      %378 = vmatprep.subr.mxu0 0.0
      %379 = vmatpush1.msra.mxu0 %v205
      %380 = vmatprep.subr.mxu0 0.0
      %381 = vmatpush1.msra.mxu0 %v206
      %382 = vmatprep.subr.mxu0 0.0
      %383 = vmatpush1.msra.mxu0 %v207
      %384 = vmatprep.subr.mxu0 0.0
      %385 = vmatpush1.msra.mxu0 %v208
      %386 = vmatprep.subr.mxu0 0.0
      %387 = vmatpush1.msra.mxu0 %v209
      %388 = vmatprep.subr.mxu0 0.0
      %389 = vmatpush1.msra.mxu0 %v210
      %390 = vmatprep.subr.mxu0 0.0
      %391 = vmatpush1.msra.mxu0 %v211
      %392 = vmatprep.subr.mxu0 0.0
      %393 = vmatpush1.msra.mxu0 %v212
      %394 = vmatprep.subr.mxu0 0.0
      %395 = vmatpush1.msra.mxu0 %v213
      %396 = vmatprep.subr.mxu0 0.0
      %397 = vmatpush1.msra.mxu0 %v214
      %398 = vmatprep.subr.mxu0 0.0
      %399 = vmatpush1.msra.mxu0 %v215
      %400 = vmatprep.subr.mxu0 0.0
      %401 = vmatpush1.msra.mxu0 %v216
      %402 = vmatprep.subr.mxu0 0.0
      %403 = vmatpush1.msra.mxu0 %v217
      %404 = vmatprep.subr.mxu0 0.0
      %405 = vmatpush1.msra.mxu0 0.0
      %406 = vmatprep.subr.mxu0 0.0
      %407 = vmatpush1.msra.mxu0 0.0
      %408 = vmatprep.subr.mxu0 0.0
      %409 = vmatpush1.msra.mxu0 0.0
      %410 = vmatprep.subr.mxu0 0.0
      %411 = vmatpush1.msra.mxu0 0.0
      %412 = vmatprep.subr.mxu0 0.0
      %413 = vmatpush1.msra.mxu0 0.0
      %414 = vmatprep.subr.mxu0 0.0
      %415 = vmatpush1.msra.mxu0 0.0
      %416 = vmatprep.subr.mxu0 0.0
      %417 = vmatpush1.msra.mxu0 0.0
      %418 = vmatprep.subr.mxu0 0.0
      %419 = vmatpush1.msra.mxu0 0.0
      %420 = vmatprep.subr.mxu0 0.0
      %421 = vmatpush1.msra.mxu0 0.0
      %422 = vmatprep.subr.mxu0 0.0
      %423 = vmatpush1.msra.mxu0 0.0
      %424 = vmatprep.subr.mxu0 0.0
      %425 = vmatpush1.msra.mxu0 0.0
      %426 = vmatprep.subr.mxu0 0.0
      %427 = vmatpush1.msra.mxu0 0.0
      %428 = vmatprep.subr.mxu0 0.0
      %429 = vmatpush1.msra.mxu0 0.0
      %430 = vmatprep.subr.mxu0 0.0
      %431 = vmatpush1.msra.mxu0 0.0
      %432 = vmatprep.subr.mxu0 0.0
      %433 = vmatpush1.msra.mxu0 0.0
      %434 = vmatprep.subr.mxu0 0.0
      %435 = vmatpush1.msra.mxu0 0.0
      %436 = vmatprep.mubr.f32.mxu0 0.0
      %437 = vmatmul.mubr.f32.gmra.mrb[0].mxu0 %v198
      %v438 = vpop.f32.mrb[0].mxu0
      %v439 = vadd.f32 %v354, %v438
      %v440 = vpop.f32.mrb[0].mxu0
      %441 = vmatprep.mubr.f32.mxu0 0.0
      %442 = vmatmul.mubr.f32.gmra.mrb[0].mxu0 %v199
      %v443 = vpop.f32.mrb[0].mxu0
      %v444 = vadd.f32 %v359, %v443
      %v445 = vpop.f32.mrb[0].mxu0
      %446 = vmatprep.mubr.f32.mxu0 0.0
      %447 = vmatmul.mubr.f32.gmra.mrb[0].mxu0 %v200
      %v448 = vpop.f32.mrb[0].mxu0
      %v449 = vadd.f32 %v364, %v448
      %v450 = vpop.f32.mrb[0].mxu0
      %451 = vmatprep.mubr.f32.mxu0 0.0
      %452 = vmatmul.mubr.f32.gmra.mrb[0].mxu0 %v201
      %v453 = vpop.f32.mrb[0].mxu0
      %v454 = vadd.f32 %v369, %v453
      %v455 = vpop.f32.mrb[0].mxu0
      %456 = vdwg.mxu0
      %s457 = scalar_lea.vmem %s1, 64
      %v458 = vld [vmem:[%s457] sm:$0xff]
      %v459 = vld [vmem:[%s457 + $0x8] sm:$0xff]
      %v460 = vld [vmem:[%s457 + $0x10] sm:$0xff]
      %v461 = vld [vmem:[%s457 + $0x18] sm:$0xff]
      %462 = vrot.lane.b32.xlu0 %v202, 119
      %v463 = vpop.permute.xlu0 %462
      %464 = vrot.lane.b32.xlu0 %v203, 119
      %v465 = vpop.permute.xlu0 %464
      %466 = vrot.lane.b32.xlu0 %v204, 119
      %v467 = vpop.permute.xlu0 %466
      %468 = vrot.lane.b32.xlu0 %v205, 119
      %v469 = vpop.permute.xlu0 %468
      %470 = vrot.lane.b32.xlu0 %v206, 119
      %v471 = vpop.permute.xlu0 %470
      %472 = vrot.lane.b32.xlu0 %v207, 119
      %v473 = vpop.permute.xlu0 %472
      %474 = vrot.lane.b32.xlu0 %v208, 119
      %v475 = vpop.permute.xlu0 %474
      %476 = vrot.lane.b32.xlu0 %v209, 119
      %v477 = vpop.permute.xlu0 %476
      %478 = vrot.lane.b32.xlu0 %v210, 119
      %v479 = vpop.permute.xlu0 %478
      %480 = vrot.lane.b32.xlu0 %v211, 119
      %v481 = vpop.permute.xlu0 %480
      %482 = vrot.lane.b32.xlu0 %v212, 119
      %v483 = vpop.permute.xlu0 %482
      %484 = vrot.lane.b32.xlu0 %v213, 119
      %v485 = vpop.permute.xlu0 %484
      %486 = vrot.lane.b32.xlu0 %v214, 119
      %v487 = vpop.permute.xlu0 %486
      %488 = vrot.lane.b32.xlu0 %v215, 119
      %v489 = vpop.permute.xlu0 %488
      %490 = vrot.lane.b32.xlu0 %v216, 119
      %v491 = vpop.permute.xlu0 %490
      %492 = vrot.lane.b32.xlu0 %v217, 119
      %v493 = vpop.permute.xlu0 %492
      %510 = vmatprep.subr.mxu0 0.0
      %511 = vmatpush1.msra.mxu0 %v463
      %512 = vmatprep.subr.mxu0 0.0
      %513 = vmatpush1.msra.mxu0 %v465
      %514 = vmatprep.subr.mxu0 0.0
      %515 = vmatpush1.msra.mxu0 %v467
      %516 = vmatprep.subr.mxu0 0.0
      %517 = vmatpush1.msra.mxu0 %v469
      %518 = vmatprep.subr.mxu0 0.0
      %519 = vmatpush1.msra.mxu0 %v471
      %520 = vmatprep.subr.mxu0 0.0
      %521 = vmatpush1.msra.mxu0 %v473
      %522 = vmatprep.subr.mxu0 0.0
      %523 = vmatpush1.msra.mxu0 %v475
      %524 = vmatprep.subr.mxu0 0.0
      %525 = vmatpush1.msra.mxu0 %v477
      %526 = vmatprep.subr.mxu0 0.0
      %527 = vmatpush1.msra.mxu0 %v479
      %528 = vmatprep.subr.mxu0 0.0
      %529 = vmatpush1.msra.mxu0 %v481
      %530 = vmatprep.subr.mxu0 0.0
      %531 = vmatpush1.msra.mxu0 %v483
      %532 = vmatprep.subr.mxu0 0.0
      %533 = vmatpush1.msra.mxu0 %v485
      %534 = vmatprep.subr.mxu0 0.0
      %535 = vmatpush1.msra.mxu0 %v487
      %536 = vmatprep.subr.mxu0 0.0
      %537 = vmatpush1.msra.mxu0 %v489
      %538 = vmatprep.subr.mxu0 0.0
      %539 = vmatpush1.msra.mxu0 %v491
      %540 = vmatprep.subr.mxu0 0.0
      %541 = vmatpush1.msra.mxu0 %v493
      %542 = vmatprep.subr.mxu0 0.0
      %543 = vmatpush1.msra.mxu0 0.0
      %544 = vmatprep.subr.mxu0 0.0
      %545 = vmatpush1.msra.mxu0 0.0
      %546 = vmatprep.subr.mxu0 0.0
      %547 = vmatpush1.msra.mxu0 0.0
      %548 = vmatprep.subr.mxu0 0.0
      %549 = vmatpush1.msra.mxu0 0.0
      %550 = vmatprep.subr.mxu0 0.0
      %551 = vmatpush1.msra.mxu0 0.0
      %552 = vmatprep.subr.mxu0 0.0
      %553 = vmatpush1.msra.mxu0 0.0
      %554 = vmatprep.subr.mxu0 0.0
      %555 = vmatpush1.msra.mxu0 0.0
      %556 = vmatprep.subr.mxu0 0.0
      %557 = vmatpush1.msra.mxu0 0.0
      %558 = vmatprep.subr.mxu0 0.0
      %559 = vmatpush1.msra.mxu0 0.0
      %560 = vmatprep.subr.mxu0 0.0
      %561 = vmatpush1.msra.mxu0 0.0
      %562 = vmatprep.subr.mxu0 0.0
      %563 = vmatpush1.msra.mxu0 0.0
      %564 = vmatprep.subr.mxu0 0.0
      %565 = vmatpush1.msra.mxu0 0.0
      %566 = vmatprep.subr.mxu0 0.0
      %567 = vmatpush1.msra.mxu0 0.0
      %568 = vmatprep.subr.mxu0 0.0
      %569 = vmatpush1.msra.mxu0 0.0
      %570 = vmatprep.subr.mxu0 0.0
      %571 = vmatpush1.msra.mxu0 0.0
      %572 = vmatprep.subr.mxu0 0.0
      %573 = vmatpush1.msra.mxu0 0.0
      %574 = vmatprep.mubr.f32.mxu0 0.0
      %575 = vmatmul.mubr.f32.gmra.mrb[0].mxu0 %v458
      %v576 = vpop.f32.mrb[0].mxu0
      %v577 = vadd.f32 0.0, %v576
      %v578 = vpop.f32.mrb[0].mxu0
      %579 = vmatprep.mubr.f32.mxu0 0.0
      %580 = vmatmul.mubr.f32.gmra.mrb[0].mxu0 %v459
      %v581 = vpop.f32.mrb[0].mxu0
      %v582 = vadd.f32 0.0, %v581
      %v583 = vpop.f32.mrb[0].mxu0
      %584 = vmatprep.mubr.f32.mxu0 0.0
      %585 = vmatmul.mubr.f32.gmra.mrb[0].mxu0 %v460
      %v586 = vpop.f32.mrb[0].mxu0
      %v587 = vadd.f32 0.0, %v586
      %v588 = vpop.f32.mrb[0].mxu0
      %589 = vmatprep.mubr.f32.mxu0 0.0
      %590 = vmatmul.mubr.f32.gmra.mrb[0].mxu0 %v461
      %v591 = vpop.f32.mrb[0].mxu0
      %v592 = vadd.f32 0.0, %v591
      %v593 = vpop.f32.mrb[0].mxu0
      %594 = vdwg.mxu0
      %v595 = vadd.f32 %v439, %v577
      %v596 = vadd.f32 %v444, %v582
      %v597 = vadd.f32 %v449, %v587
      %v598 = vadd.f32 %v454, %v592
      %s599 = scalar_lea.vmem %s1, 96
      %v600 = vld [vmem:[%s599] sm:$0xff]
      %v601 = vld [vmem:[%s599 + $0x8] sm:$0xff]
      %v602 = vld [vmem:[%s599 + $0x10] sm:$0xff]
      %v603 = vld [vmem:[%s599 + $0x18] sm:$0xff]
      %604 = vrot.lane.b32.xlu0 %v202, 118
      %v605 = vpop.permute.xlu0 %604
      %606 = vrot.lane.b32.xlu0 %v203, 118
      %v607 = vpop.permute.xlu0 %606
      %608 = vrot.lane.b32.xlu0 %v204, 118
      %v609 = vpop.permute.xlu0 %608
      %610 = vrot.lane.b32.xlu0 %v205, 118
      %v611 = vpop.permute.xlu0 %610
      %612 = vrot.lane.b32.xlu0 %v206, 118
      %v613 = vpop.permute.xlu0 %612
      %614 = vrot.lane.b32.xlu0 %v207, 118
      %v615 = vpop.permute.xlu0 %614
      %616 = vrot.lane.b32.xlu0 %v208, 118
      %v617 = vpop.permute.xlu0 %616
      %618 = vrot.lane.b32.xlu0 %v209, 118
      %v619 = vpop.permute.xlu0 %618
      %620 = vrot.lane.b32.xlu0 %v210, 118
      %v621 = vpop.permute.xlu0 %620
      %622 = vrot.lane.b32.xlu0 %v211, 118
      %v623 = vpop.permute.xlu0 %622
      %624 = vrot.lane.b32.xlu0 %v212, 118
      %v625 = vpop.permute.xlu0 %624
      %626 = vrot.lane.b32.xlu0 %v213, 118
      %v627 = vpop.permute.xlu0 %626
      %628 = vrot.lane.b32.xlu0 %v214, 118
      %v629 = vpop.permute.xlu0 %628
      %630 = vrot.lane.b32.xlu0 %v215, 118
      %v631 = vpop.permute.xlu0 %630
      %632 = vrot.lane.b32.xlu0 %v216, 118
      %v633 = vpop.permute.xlu0 %632
      %634 = vrot.lane.b32.xlu0 %v217, 118
      %v635 = vpop.permute.xlu0 %634
      %652 = vmatprep.subr.mxu0 0.0
      %653 = vmatpush1.msra.mxu0 %v605
      %654 = vmatprep.subr.mxu0 0.0
      %655 = vmatpush1.msra.mxu0 %v607
      %656 = vmatprep.subr.mxu0 0.0
      %657 = vmatpush1.msra.mxu0 %v609
      %658 = vmatprep.subr.mxu0 0.0
      %659 = vmatpush1.msra.mxu0 %v611
      %660 = vmatprep.subr.mxu0 0.0
      %661 = vmatpush1.msra.mxu0 %v613
      %662 = vmatprep.subr.mxu0 0.0
      %663 = vmatpush1.msra.mxu0 %v615
      %664 = vmatprep.subr.mxu0 0.0
      %665 = vmatpush1.msra.mxu0 %v617
      %666 = vmatprep.subr.mxu0 0.0
      %667 = vmatpush1.msra.mxu0 %v619
      %668 = vmatprep.subr.mxu0 0.0
      %669 = vmatpush1.msra.mxu0 %v621
      %670 = vmatprep.subr.mxu0 0.0
      %671 = vmatpush1.msra.mxu0 %v623
      %672 = vmatprep.subr.mxu0 0.0
      %673 = vmatpush1.msra.mxu0 %v625
      %674 = vmatprep.subr.mxu0 0.0
      %675 = vmatpush1.msra.mxu0 %v627
      %676 = vmatprep.subr.mxu0 0.0
      %677 = vmatpush1.msra.mxu0 %v629
      %678 = vmatprep.subr.mxu0 0.0
      %679 = vmatpush1.msra.mxu0 %v631
      %680 = vmatprep.subr.mxu0 0.0
      %681 = vmatpush1.msra.mxu0 %v633
      %682 = vmatprep.subr.mxu0 0.0
      %683 = vmatpush1.msra.mxu0 %v635
      %684 = vmatprep.subr.mxu0 0.0
      %685 = vmatpush1.msra.mxu0 0.0
      %686 = vmatprep.subr.mxu0 0.0
      %687 = vmatpush1.msra.mxu0 0.0
      %688 = vmatprep.subr.mxu0 0.0
      %689 = vmatpush1.msra.mxu0 0.0
      %690 = vmatprep.subr.mxu0 0.0
      %691 = vmatpush1.msra.mxu0 0.0
      %692 = vmatprep.subr.mxu0 0.0
      %693 = vmatpush1.msra.mxu0 0.0
      %694 = vmatprep.subr.mxu0 0.0
      %695 = vmatpush1.msra.mxu0 0.0
      %696 = vmatprep.subr.mxu0 0.0
      %697 = vmatpush1.msra.mxu0 0.0
      %698 = vmatprep.subr.mxu0 0.0
      %699 = vmatpush1.msra.mxu0 0.0
      %700 = vmatprep.subr.mxu0 0.0
      %701 = vmatpush1.msra.mxu0 0.0
      %702 = vmatprep.subr.mxu0 0.0
      %703 = vmatpush1.msra.mxu0 0.0
      %704 = vmatprep.subr.mxu0 0.0
      %705 = vmatpush1.msra.mxu0 0.0
      %706 = vmatprep.subr.mxu0 0.0
      %707 = vmatpush1.msra.mxu0 0.0
      %708 = vmatprep.subr.mxu0 0.0
      %709 = vmatpush1.msra.mxu0 0.0
      %710 = vmatprep.subr.mxu0 0.0
      %711 = vmatpush1.msra.mxu0 0.0
      %712 = vmatprep.subr.mxu0 0.0
      %713 = vmatpush1.msra.mxu0 0.0
      %714 = vmatprep.subr.mxu0 0.0
      %715 = vmatpush1.msra.mxu0 0.0
      %716 = vmatprep.mubr.f32.mxu0 0.0
      %717 = vmatmul.mubr.f32.gmra.mrb[0].mxu0 %v600
      %v718 = vpop.f32.mrb[0].mxu0
      %v719 = vadd.f32 0.0, %v718
      %v720 = vpop.f32.mrb[0].mxu0
      %721 = vmatprep.mubr.f32.mxu0 0.0
      %722 = vmatmul.mubr.f32.gmra.mrb[0].mxu0 %v601
      %v723 = vpop.f32.mrb[0].mxu0
      %v724 = vadd.f32 0.0, %v723
      %v725 = vpop.f32.mrb[0].mxu0
      %726 = vmatprep.mubr.f32.mxu0 0.0
      %727 = vmatmul.mubr.f32.gmra.mrb[0].mxu0 %v602
      %v728 = vpop.f32.mrb[0].mxu0
      %v729 = vadd.f32 0.0, %v728
      %v730 = vpop.f32.mrb[0].mxu0
      %731 = vmatprep.mubr.f32.mxu0 0.0
      %732 = vmatmul.mubr.f32.gmra.mrb[0].mxu0 %v603
      %v733 = vpop.f32.mrb[0].mxu0
      %v734 = vadd.f32 0.0, %v733
      %v735 = vpop.f32.mrb[0].mxu0
      %736 = vdwg.mxu0
      %v737 = vadd.f32 %v595, %v719
      %v738 = vadd.f32 %v596, %v724
      %v739 = vadd.f32 %v597, %v729
      %v740 = vadd.f32 %v598, %v734
      %vm741 = vcmp.ge.f32.partialorder %v737, 0.0
      %vm742 = vcmp.ge.f32.partialorder %v738, 0.0
      %vm743 = vcmp.ge.f32.partialorder %v739, 0.0
      %vm744 = vcmp.ge.f32.partialorder %v740, 0.0
      %v745 = vmul.f32 %v737, 0.2
      %v746 = vmul.f32 %v738, 0.2
      %v747 = vmul.f32 %v739, 0.2
      %v748 = vmul.f32 %v740, 0.2
      %v749 = vsel %vm741, %v737, %v745
      %v750 = vsel %vm742, %v738, %v746
      %v751 = vsel %vm743, %v739, %v747
      %v752 = vsel %vm744, %v740, %v748
      %v753 = vld [vmem:[%s3] sm:$0x1]
      %v755 = vlaneseq
      %v756 = vshrl.u32 %v755, 7
      %v757 = vsub.s32 0, %v756
      %v758 = vrot.slane %v753, %v757
      %v760 = vmul.f32 %v749, %v758
      %v761 = vmul.f32 %v750, %v758
      %v762 = vmul.f32 %v751, %v758
      %v763 = vmul.f32 %v752, %v758
      %764 = vst [vmem:[#allocation2] sm:$0xff] 0.0
      %765 = vst [vmem:[#allocation2 + $0x8] sm:$0xff] 0.0
      %766 = vst [vmem:[#allocation2 + $0x10] sm:$0xff] 0.0
      %767 = vst [vmem:[#allocation2 + $0x18] sm:$0xff] 0.0
      %772 = vrot.lane.b32.xlu0 %v760, 10
      %v773 = vpop.permute.xlu0 %772
      %774 = vrot.lane.b32.xlu0 %v761, 10
      %v775 = vpop.permute.xlu0 %774
      %776 = vrot.lane.b32.xlu0 %v762, 10
      %v777 = vpop.permute.xlu0 %776
      %778 = vrot.lane.b32.xlu0 %v763, 10
      %v779 = vpop.permute.xlu0 %778
      %vm784 = vcmask 744528
      %785 = vst.msk [vmem:[#allocation2] sm:$0xff] %vm784, %v773
      %786 = vst.msk [vmem:[#allocation2 + $0x8] sm:$0xff] %vm784, %v775
      %787 = vst.msk [vmem:[#allocation2 + $0x10] sm:$0xff] %vm784, %v777
      %788 = vst.msk [vmem:[#allocation2 + $0x18] sm:$0xff] %vm784, %v779
      %v789 = vld [vmem:[%s2] sm:$0xff]
      %v790 = vld [vmem:[%s2 + $0x8] sm:$0xff]
      %v791 = vld [vmem:[%s2 + $0x10] sm:$0xff]
      %v792 = vld [vmem:[%s2 + $0x18] sm:$0xff]
      %v793 = vld [vmem:[#allocation2] sm:$0xff]
      %v794 = vld [vmem:[#allocation2 + $0x8] sm:$0xff]
      %v795 = vld [vmem:[#allocation2 + $0x10] sm:$0xff]
      %v796 = vld [vmem:[#allocation2 + $0x18] sm:$0xff]
      %s797 = scalar_lea.vmem %s2, 32
      %v798 = vld [vmem:[%s797] sm:$0xff]
      %v799 = vld [vmem:[%s797 + $0x8] sm:$0xff]
      %v800 = vld [vmem:[%s797 + $0x10] sm:$0xff]
      %v801 = vld [vmem:[%s797 + $0x18] sm:$0xff]
      %806 = vrot.lane.b32.xlu0 %v793, 127
      %v807 = vpop.permute.xlu0 %806
      %808 = vrot.lane.b32.xlu0 %v794, 127
      %v809 = vpop.permute.xlu0 %808
      %810 = vrot.lane.b32.xlu0 %v795, 127
      %v811 = vpop.permute.xlu0 %810
      %812 = vrot.lane.b32.xlu0 %v796, 127
      %v813 = vpop.permute.xlu0 %812
      %vm818 = vcmask 261120
      %v820 = vsel %vm818, %v798, 0
      %v823 = vsel %vm818, %v799, 0
      %v826 = vsel %vm818, %v800, 0
      %v829 = vsel %vm818, %v801, 0
      %831 = vmatprep.subr.mxu0 0.0
      %832 = vmatpush1.msra.mxu0 %v807
      %833 = vmatprep.subr.mxu0 0.0
      %834 = vmatpush1.msra.mxu0 %v809
      %835 = vmatprep.subr.mxu0 0.0
      %836 = vmatpush1.msra.mxu0 %v811
      %837 = vmatprep.subr.mxu0 0.0
      %838 = vmatpush1.msra.mxu0 %v813
      %839 = vmatprep.subr.mxu0 0.0
      %840 = vmatpush1.msra.mxu0 0.0
      %841 = vmatprep.subr.mxu0 0.0
      %842 = vmatpush1.msra.mxu0 0.0
      %843 = vmatprep.subr.mxu0 0.0
      %844 = vmatpush1.msra.mxu0 0.0
      %845 = vmatprep.subr.mxu0 0.0
      %846 = vmatpush1.msra.mxu0 0.0
      %847 = vmatprep.subr.mxu0 0.0
      %848 = vmatpush1.msra.mxu0 0.0
      %849 = vmatprep.subr.mxu0 0.0
      %850 = vmatpush1.msra.mxu0 0.0
      %851 = vmatprep.subr.mxu0 0.0
      %852 = vmatpush1.msra.mxu0 0.0
      %853 = vmatprep.subr.mxu0 0.0
      %854 = vmatpush1.msra.mxu0 0.0
      %855 = vmatprep.subr.mxu0 0.0
      %856 = vmatpush1.msra.mxu0 0.0
      %857 = vmatprep.subr.mxu0 0.0
      %858 = vmatpush1.msra.mxu0 0.0
      %859 = vmatprep.subr.mxu0 0.0
      %860 = vmatpush1.msra.mxu0 0.0
      %861 = vmatprep.subr.mxu0 0.0
      %862 = vmatpush1.msra.mxu0 0.0
      %863 = vmatprep.subr.mxu0 0.0
      %864 = vmatpush1.msra.mxu0 0.0
      %865 = vmatprep.subr.mxu0 0.0
      %866 = vmatpush1.msra.mxu0 0.0
      %867 = vmatprep.subr.mxu0 0.0
      %868 = vmatpush1.msra.mxu0 0.0
      %869 = vmatprep.subr.mxu0 0.0
      %870 = vmatpush1.msra.mxu0 0.0
      %871 = vmatprep.subr.mxu0 0.0
      %872 = vmatpush1.msra.mxu0 0.0
      %873 = vmatprep.subr.mxu0 0.0
      %874 = vmatpush1.msra.mxu0 0.0
      %875 = vmatprep.subr.mxu0 0.0
      %876 = vmatpush1.msra.mxu0 0.0
      %877 = vmatprep.subr.mxu0 0.0
      %878 = vmatpush1.msra.mxu0 0.0
      %879 = vmatprep.subr.mxu0 0.0
      %880 = vmatpush1.msra.mxu0 0.0
      %881 = vmatprep.subr.mxu0 0.0
      %882 = vmatpush1.msra.mxu0 0.0
      %883 = vmatprep.subr.mxu0 0.0
      %884 = vmatpush1.msra.mxu0 0.0
      %885 = vmatprep.subr.mxu0 0.0
      %886 = vmatpush1.msra.mxu0 0.0
      %887 = vmatprep.subr.mxu0 0.0
      %888 = vmatpush1.msra.mxu0 0.0
      %889 = vmatprep.subr.mxu0 0.0
      %890 = vmatpush1.msra.mxu0 0.0
      %891 = vmatprep.subr.mxu0 0.0
      %892 = vmatpush1.msra.mxu0 0.0
      %893 = vmatprep.subr.mxu0 0.0
      %894 = vmatpush1.msra.mxu0 0.0
      %895 = vmatprep.mubr.f32.mxu0 0.0
      %896 = vmatmul.mubr.f32.gmra.mrb[0].mxu0 %v820
      %v897 = vpop.f32.mrb[0].mxu0
      %v898 = vadd.f32 0.0, %v897
      %v899 = vpop.f32.mrb[0].mxu0
      %900 = vmatprep.mubr.f32.mxu0 0.0
      %901 = vmatmul.mubr.f32.gmra.mrb[0].mxu0 %v823
      %v902 = vpop.f32.mrb[0].mxu0
      %v903 = vadd.f32 0.0, %v902
      %v904 = vpop.f32.mrb[0].mxu0
      %905 = vmatprep.mubr.f32.mxu0 0.0
      %906 = vmatmul.mubr.f32.gmra.mrb[0].mxu0 %v826
      %v907 = vpop.f32.mrb[0].mxu0
      %v908 = vadd.f32 0.0, %v907
      %v909 = vpop.f32.mrb[0].mxu0
      %910 = vmatprep.mubr.f32.mxu0 0.0
      %911 = vmatmul.mubr.f32.gmra.mrb[0].mxu0 %v829
      %v912 = vpop.f32.mrb[0].mxu0
      %v913 = vadd.f32 0.0, %v912
      %v914 = vpop.f32.mrb[0].mxu0
      %915 = vdwg.mxu0
      %v917 = vsel %vm818, %v789, 0
      %v920 = vsel %vm818, %v790, 0
      %v923 = vsel %vm818, %v791, 0
      %v926 = vsel %vm818, %v792, 0
      %928 = vmatprep.subr.mxu0 0.0
      %929 = vmatpush1.msra.mxu0 %v793
      %930 = vmatprep.subr.mxu0 0.0
      %931 = vmatpush1.msra.mxu0 %v794
      %932 = vmatprep.subr.mxu0 0.0
      %933 = vmatpush1.msra.mxu0 %v795
      %934 = vmatprep.subr.mxu0 0.0
      %935 = vmatpush1.msra.mxu0 %v796
      %936 = vmatprep.subr.mxu0 0.0
      %937 = vmatpush1.msra.mxu0 0.0
      %938 = vmatprep.subr.mxu0 0.0
      %939 = vmatpush1.msra.mxu0 0.0
      %940 = vmatprep.subr.mxu0 0.0
      %941 = vmatpush1.msra.mxu0 0.0
      %942 = vmatprep.subr.mxu0 0.0
      %943 = vmatpush1.msra.mxu0 0.0
      %944 = vmatprep.subr.mxu0 0.0
      %945 = vmatpush1.msra.mxu0 0.0
      %946 = vmatprep.subr.mxu0 0.0
      %947 = vmatpush1.msra.mxu0 0.0
      %948 = vmatprep.subr.mxu0 0.0
      %949 = vmatpush1.msra.mxu0 0.0
      %950 = vmatprep.subr.mxu0 0.0
      %951 = vmatpush1.msra.mxu0 0.0
      %952 = vmatprep.subr.mxu0 0.0
      %953 = vmatpush1.msra.mxu0 0.0
      %954 = vmatprep.subr.mxu0 0.0
      %955 = vmatpush1.msra.mxu0 0.0
      %956 = vmatprep.subr.mxu0 0.0
      %957 = vmatpush1.msra.mxu0 0.0
      %958 = vmatprep.subr.mxu0 0.0
      %959 = vmatpush1.msra.mxu0 0.0
      %960 = vmatprep.subr.mxu0 0.0
      %961 = vmatpush1.msra.mxu0 0.0
      %962 = vmatprep.subr.mxu0 0.0
      %963 = vmatpush1.msra.mxu0 0.0
      %964 = vmatprep.subr.mxu0 0.0
      %965 = vmatpush1.msra.mxu0 0.0
      %966 = vmatprep.subr.mxu0 0.0
      %967 = vmatpush1.msra.mxu0 0.0
      %968 = vmatprep.subr.mxu0 0.0
      %969 = vmatpush1.msra.mxu0 0.0
      %970 = vmatprep.subr.mxu0 0.0
      %971 = vmatpush1.msra.mxu0 0.0
      %972 = vmatprep.subr.mxu0 0.0
      %973 = vmatpush1.msra.mxu0 0.0
      %974 = vmatprep.subr.mxu0 0.0
      %975 = vmatpush1.msra.mxu0 0.0
      %976 = vmatprep.subr.mxu0 0.0
      %977 = vmatpush1.msra.mxu0 0.0
      %978 = vmatprep.subr.mxu0 0.0
      %979 = vmatpush1.msra.mxu0 0.0
      %980 = vmatprep.subr.mxu0 0.0
      %981 = vmatpush1.msra.mxu0 0.0
      %982 = vmatprep.subr.mxu0 0.0
      %983 = vmatpush1.msra.mxu0 0.0
      %984 = vmatprep.subr.mxu0 0.0
      %985 = vmatpush1.msra.mxu0 0.0
      %986 = vmatprep.subr.mxu0 0.0
      %987 = vmatpush1.msra.mxu0 0.0
      %988 = vmatprep.subr.mxu0 0.0
      %989 = vmatpush1.msra.mxu0 0.0
      %990 = vmatprep.subr.mxu0 0.0
      %991 = vmatpush1.msra.mxu0 0.0
      %992 = vmatprep.mubr.f32.mxu0 0.0
      %993 = vmatmul.mubr.f32.gmra.mrb[0].mxu0 %v917
      %v994 = vpop.f32.mrb[0].mxu0
      %v995 = vadd.f32 %v898, %v994
      %v996 = vpop.f32.mrb[0].mxu0
      %997 = vmatprep.mubr.f32.mxu0 0.0
      %998 = vmatmul.mubr.f32.gmra.mrb[0].mxu0 %v920
      %v999 = vpop.f32.mrb[0].mxu0
      %v1000 = vadd.f32 %v903, %v999
      %v1001 = vpop.f32.mrb[0].mxu0
      %1002 = vmatprep.mubr.f32.mxu0 0.0
      %1003 = vmatmul.mubr.f32.gmra.mrb[0].mxu0 %v923
      %v1004 = vpop.f32.mrb[0].mxu0
      %v1005 = vadd.f32 %v908, %v1004
      %v1006 = vpop.f32.mrb[0].mxu0
      %1007 = vmatprep.mubr.f32.mxu0 0.0
      %1008 = vmatmul.mubr.f32.gmra.mrb[0].mxu0 %v926
      %v1009 = vpop.f32.mrb[0].mxu0
      %v1010 = vadd.f32 %v913, %v1009
      %v1011 = vpop.f32.mrb[0].mxu0
      %1012 = vdwg.mxu0
      %s1013 = scalar_lea.vmem %s2, 64
      %v1014 = vld [vmem:[%s1013] sm:$0xff]
      %v1015 = vld [vmem:[%s1013 + $0x8] sm:$0xff]
      %v1016 = vld [vmem:[%s1013 + $0x10] sm:$0xff]
      %v1017 = vld [vmem:[%s1013 + $0x18] sm:$0xff]
      %1018 = vrot.lane.b32.xlu0 %v793, 126
      %v1019 = vpop.permute.xlu0 %1018
      %1020 = vrot.lane.b32.xlu0 %v794, 126
      %v1021 = vpop.permute.xlu0 %1020
      %1022 = vrot.lane.b32.xlu0 %v795, 126
      %v1023 = vpop.permute.xlu0 %1022
      %1024 = vrot.lane.b32.xlu0 %v796, 126
      %v1025 = vpop.permute.xlu0 %1024
      %v1031 = vsel %vm818, %v1014, 0
      %v1034 = vsel %vm818, %v1015, 0
      %v1037 = vsel %vm818, %v1016, 0
      %v1040 = vsel %vm818, %v1017, 0
      %1042 = vmatprep.subr.mxu0 0.0
      %1043 = vmatpush1.msra.mxu0 %v1019
      %1044 = vmatprep.subr.mxu0 0.0
      %1045 = vmatpush1.msra.mxu0 %v1021
      %1046 = vmatprep.subr.mxu0 0.0
      %1047 = vmatpush1.msra.mxu0 %v1023
      %1048 = vmatprep.subr.mxu0 0.0
      %1049 = vmatpush1.msra.mxu0 %v1025
      %1050 = vmatprep.subr.mxu0 0.0
      %1051 = vmatpush1.msra.mxu0 0.0
      %1052 = vmatprep.subr.mxu0 0.0
      %1053 = vmatpush1.msra.mxu0 0.0
      %1054 = vmatprep.subr.mxu0 0.0
      %1055 = vmatpush1.msra.mxu0 0.0
      %1056 = vmatprep.subr.mxu0 0.0
      %1057 = vmatpush1.msra.mxu0 0.0
      %1058 = vmatprep.subr.mxu0 0.0
      %1059 = vmatpush1.msra.mxu0 0.0
      %1060 = vmatprep.subr.mxu0 0.0
      %1061 = vmatpush1.msra.mxu0 0.0
      %1062 = vmatprep.subr.mxu0 0.0
      %1063 = vmatpush1.msra.mxu0 0.0
      %1064 = vmatprep.subr.mxu0 0.0
      %1065 = vmatpush1.msra.mxu0 0.0
      %1066 = vmatprep.subr.mxu0 0.0
      %1067 = vmatpush1.msra.mxu0 0.0
      %1068 = vmatprep.subr.mxu0 0.0
      %1069 = vmatpush1.msra.mxu0 0.0
      %1070 = vmatprep.subr.mxu0 0.0
      %1071 = vmatpush1.msra.mxu0 0.0
      %1072 = vmatprep.subr.mxu0 0.0
      %1073 = vmatpush1.msra.mxu0 0.0
      %1074 = vmatprep.subr.mxu0 0.0
      %1075 = vmatpush1.msra.mxu0 0.0
      %1076 = vmatprep.subr.mxu0 0.0
      %1077 = vmatpush1.msra.mxu0 0.0
      %1078 = vmatprep.subr.mxu0 0.0
      %1079 = vmatpush1.msra.mxu0 0.0
      %1080 = vmatprep.subr.mxu0 0.0
      %1081 = vmatpush1.msra.mxu0 0.0
      %1082 = vmatprep.subr.mxu0 0.0
      %1083 = vmatpush1.msra.mxu0 0.0
      %1084 = vmatprep.subr.mxu0 0.0
      %1085 = vmatpush1.msra.mxu0 0.0
      %1086 = vmatprep.subr.mxu0 0.0
      %1087 = vmatpush1.msra.mxu0 0.0
      %1088 = vmatprep.subr.mxu0 0.0
      %1089 = vmatpush1.msra.mxu0 0.0
      %1090 = vmatprep.subr.mxu0 0.0
      %1091 = vmatpush1.msra.mxu0 0.0
      %1092 = vmatprep.subr.mxu0 0.0
      %1093 = vmatpush1.msra.mxu0 0.0
      %1094 = vmatprep.subr.mxu0 0.0
      %1095 = vmatpush1.msra.mxu0 0.0
      %1096 = vmatprep.subr.mxu0 0.0
      %1097 = vmatpush1.msra.mxu0 0.0
      %1098 = vmatprep.subr.mxu0 0.0
      %1099 = vmatpush1.msra.mxu0 0.0
      %1100 = vmatprep.subr.mxu0 0.0
      %1101 = vmatpush1.msra.mxu0 0.0
      %1102 = vmatprep.subr.mxu0 0.0
      %1103 = vmatpush1.msra.mxu0 0.0
      %1104 = vmatprep.subr.mxu0 0.0
      %1105 = vmatpush1.msra.mxu0 0.0
      %1106 = vmatprep.mubr.f32.mxu0 0.0
      %1107 = vmatmul.mubr.f32.gmra.mrb[0].mxu0 %v1031
      %v1108 = vpop.f32.mrb[0].mxu0
      %v1109 = vadd.f32 0.0, %v1108
      %v1110 = vpop.f32.mrb[0].mxu0
      %1111 = vmatprep.mubr.f32.mxu0 0.0
      %1112 = vmatmul.mubr.f32.gmra.mrb[0].mxu0 %v1034
      %v1113 = vpop.f32.mrb[0].mxu0
      %v1114 = vadd.f32 0.0, %v1113
      %v1115 = vpop.f32.mrb[0].mxu0
      %1116 = vmatprep.mubr.f32.mxu0 0.0
      %1117 = vmatmul.mubr.f32.gmra.mrb[0].mxu0 %v1037
      %v1118 = vpop.f32.mrb[0].mxu0
      %v1119 = vadd.f32 0.0, %v1118
      %v1120 = vpop.f32.mrb[0].mxu0
      %1121 = vmatprep.mubr.f32.mxu0 0.0
      %1122 = vmatmul.mubr.f32.gmra.mrb[0].mxu0 %v1040
      %v1123 = vpop.f32.mrb[0].mxu0
      %v1124 = vadd.f32 0.0, %v1123
      %v1125 = vpop.f32.mrb[0].mxu0
      %1126 = vdwg.mxu0
      %v1127 = vadd.f32 %v995, %v1109
      %v1128 = vadd.f32 %v1000, %v1114
      %v1129 = vadd.f32 %v1005, %v1119
      %v1130 = vadd.f32 %v1010, %v1124
      %s1131 = scalar_lea.vmem %s2, 96
      %v1132 = vld [vmem:[%s1131] sm:$0xff]
      %v1133 = vld [vmem:[%s1131 + $0x8] sm:$0xff]
      %v1134 = vld [vmem:[%s1131 + $0x10] sm:$0xff]
      %v1135 = vld [vmem:[%s1131 + $0x18] sm:$0xff]
      %1136 = vrot.lane.b32.xlu0 %v793, 119
      %v1137 = vpop.permute.xlu0 %1136
      %1138 = vrot.lane.b32.xlu0 %v794, 119
      %v1139 = vpop.permute.xlu0 %1138
      %1140 = vrot.lane.b32.xlu0 %v795, 119
      %v1141 = vpop.permute.xlu0 %1140
      %1142 = vrot.lane.b32.xlu0 %v796, 119
      %v1143 = vpop.permute.xlu0 %1142
      %v1149 = vsel %vm818, %v1132, 0
      %v1152 = vsel %vm818, %v1133, 0
      %v1155 = vsel %vm818, %v1134, 0
      %v1158 = vsel %vm818, %v1135, 0
      %1160 = vmatprep.subr.mxu0 0.0
      %1161 = vmatpush1.msra.mxu0 %v1137
      %1162 = vmatprep.subr.mxu0 0.0
      %1163 = vmatpush1.msra.mxu0 %v1139
      %1164 = vmatprep.subr.mxu0 0.0
      %1165 = vmatpush1.msra.mxu0 %v1141
      %1166 = vmatprep.subr.mxu0 0.0
      %1167 = vmatpush1.msra.mxu0 %v1143
      %1168 = vmatprep.subr.mxu0 0.0
      %1169 = vmatpush1.msra.mxu0 0.0
      %1170 = vmatprep.subr.mxu0 0.0
      %1171 = vmatpush1.msra.mxu0 0.0
      %1172 = vmatprep.subr.mxu0 0.0
      %1173 = vmatpush1.msra.mxu0 0.0
      %1174 = vmatprep.subr.mxu0 0.0
      %1175 = vmatpush1.msra.mxu0 0.0
      %1176 = vmatprep.subr.mxu0 0.0
      %1177 = vmatpush1.msra.mxu0 0.0
      %1178 = vmatprep.subr.mxu0 0.0
      %1179 = vmatpush1.msra.mxu0 0.0
      %1180 = vmatprep.subr.mxu0 0.0
      %1181 = vmatpush1.msra.mxu0 0.0
      %1182 = vmatprep.subr.mxu0 0.0
      %1183 = vmatpush1.msra.mxu0 0.0
      %1184 = vmatprep.subr.mxu0 0.0
      %1185 = vmatpush1.msra.mxu0 0.0
      %1186 = vmatprep.subr.mxu0 0.0
      %1187 = vmatpush1.msra.mxu0 0.0
      %1188 = vmatprep.subr.mxu0 0.0
      %1189 = vmatpush1.msra.mxu0 0.0
      %1190 = vmatprep.subr.mxu0 0.0
      %1191 = vmatpush1.msra.mxu0 0.0
      %1192 = vmatprep.subr.mxu0 0.0
      %1193 = vmatpush1.msra.mxu0 0.0
      %1194 = vmatprep.subr.mxu0 0.0
      %1195 = vmatpush1.msra.mxu0 0.0
      %1196 = vmatprep.subr.mxu0 0.0
      %1197 = vmatpush1.msra.mxu0 0.0
      %1198 = vmatprep.subr.mxu0 0.0
      %1199 = vmatpush1.msra.mxu0 0.0
      %1200 = vmatprep.subr.mxu0 0.0
      %1201 = vmatpush1.msra.mxu0 0.0
      %1202 = vmatprep.subr.mxu0 0.0
      %1203 = vmatpush1.msra.mxu0 0.0
      %1204 = vmatprep.subr.mxu0 0.0
      %1205 = vmatpush1.msra.mxu0 0.0
      %1206 = vmatprep.subr.mxu0 0.0
      %1207 = vmatpush1.msra.mxu0 0.0
      %1208 = vmatprep.subr.mxu0 0.0
      %1209 = vmatpush1.msra.mxu0 0.0
      %1210 = vmatprep.subr.mxu0 0.0
      %1211 = vmatpush1.msra.mxu0 0.0
      %1212 = vmatprep.subr.mxu0 0.0
      %1213 = vmatpush1.msra.mxu0 0.0
      %1214 = vmatprep.subr.mxu0 0.0
      %1215 = vmatpush1.msra.mxu0 0.0
      %1216 = vmatprep.subr.mxu0 0.0
      %1217 = vmatpush1.msra.mxu0 0.0
      %1218 = vmatprep.subr.mxu0 0.0
      %1219 = vmatpush1.msra.mxu0 0.0
      %1220 = vmatprep.subr.mxu0 0.0
      %1221 = vmatpush1.msra.mxu0 0.0
      %1222 = vmatprep.subr.mxu0 0.0
      %1223 = vmatpush1.msra.mxu0 0.0
      %1224 = vmatprep.mubr.f32.mxu0 0.0
      %1225 = vmatmul.mubr.f32.gmra.mrb[0].mxu0 %v1149
      %v1226 = vpop.f32.mrb[0].mxu0
      %v1227 = vadd.f32 0.0, %v1226
      %v1228 = vpop.f32.mrb[0].mxu0
      %1229 = vmatprep.mubr.f32.mxu0 0.0
      %1230 = vmatmul.mubr.f32.gmra.mrb[0].mxu0 %v1152
      %v1231 = vpop.f32.mrb[0].mxu0
      %v1232 = vadd.f32 0.0, %v1231
      %v1233 = vpop.f32.mrb[0].mxu0
      %1234 = vmatprep.mubr.f32.mxu0 0.0
      %1235 = vmatmul.mubr.f32.gmra.mrb[0].mxu0 %v1155
      %v1236 = vpop.f32.mrb[0].mxu0
      %v1237 = vadd.f32 0.0, %v1236
      %v1238 = vpop.f32.mrb[0].mxu0
      %1239 = vmatprep.mubr.f32.mxu0 0.0
      %1240 = vmatmul.mubr.f32.gmra.mrb[0].mxu0 %v1158
      %v1241 = vpop.f32.mrb[0].mxu0
      %v1242 = vadd.f32 0.0, %v1241
      %v1243 = vpop.f32.mrb[0].mxu0
      %1244 = vdwg.mxu0
      %v1245 = vadd.f32 %v1127, %v1227
      %v1246 = vadd.f32 %v1128, %v1232
      %v1247 = vadd.f32 %v1129, %v1237
      %v1248 = vadd.f32 %v1130, %v1242
      %s1249 = scalar_lea.vmem %s2, 128
      %v1250 = vld [vmem:[%s1249] sm:$0xff]
      %v1251 = vld [vmem:[%s1249 + $0x8] sm:$0xff]
      %v1252 = vld [vmem:[%s1249 + $0x10] sm:$0xff]
      %v1253 = vld [vmem:[%s1249 + $0x18] sm:$0xff]
      %1254 = vrot.lane.b32.xlu0 %v793, 118
      %v1255 = vpop.permute.xlu0 %1254
      %1256 = vrot.lane.b32.xlu0 %v794, 118
      %v1257 = vpop.permute.xlu0 %1256
      %1258 = vrot.lane.b32.xlu0 %v795, 118
      %v1259 = vpop.permute.xlu0 %1258
      %1260 = vrot.lane.b32.xlu0 %v796, 118
      %v1261 = vpop.permute.xlu0 %1260
      %v1267 = vsel %vm818, %v1250, 0
      %v1270 = vsel %vm818, %v1251, 0
      %v1273 = vsel %vm818, %v1252, 0
      %v1276 = vsel %vm818, %v1253, 0
      %1278 = vmatprep.subr.mxu0 0.0
      %1279 = vmatpush1.msra.mxu0 %v1255
      %1280 = vmatprep.subr.mxu0 0.0
      %1281 = vmatpush1.msra.mxu0 %v1257
      %1282 = vmatprep.subr.mxu0 0.0
      %1283 = vmatpush1.msra.mxu0 %v1259
      %1284 = vmatprep.subr.mxu0 0.0
      %1285 = vmatpush1.msra.mxu0 %v1261
      %1286 = vmatprep.subr.mxu0 0.0
      %1287 = vmatpush1.msra.mxu0 0.0
      %1288 = vmatprep.subr.mxu0 0.0
      %1289 = vmatpush1.msra.mxu0 0.0
      %1290 = vmatprep.subr.mxu0 0.0
      %1291 = vmatpush1.msra.mxu0 0.0
      %1292 = vmatprep.subr.mxu0 0.0
      %1293 = vmatpush1.msra.mxu0 0.0
      %1294 = vmatprep.subr.mxu0 0.0
      %1295 = vmatpush1.msra.mxu0 0.0
      %1296 = vmatprep.subr.mxu0 0.0
      %1297 = vmatpush1.msra.mxu0 0.0
      %1298 = vmatprep.subr.mxu0 0.0
      %1299 = vmatpush1.msra.mxu0 0.0
      %1300 = vmatprep.subr.mxu0 0.0
      %1301 = vmatpush1.msra.mxu0 0.0
      %1302 = vmatprep.subr.mxu0 0.0
      %1303 = vmatpush1.msra.mxu0 0.0
      %1304 = vmatprep.subr.mxu0 0.0
      %1305 = vmatpush1.msra.mxu0 0.0
      %1306 = vmatprep.subr.mxu0 0.0
      %1307 = vmatpush1.msra.mxu0 0.0
      %1308 = vmatprep.subr.mxu0 0.0
      %1309 = vmatpush1.msra.mxu0 0.0
      %1310 = vmatprep.subr.mxu0 0.0
      %1311 = vmatpush1.msra.mxu0 0.0
      %1312 = vmatprep.subr.mxu0 0.0
      %1313 = vmatpush1.msra.mxu0 0.0
      %1314 = vmatprep.subr.mxu0 0.0
      %1315 = vmatpush1.msra.mxu0 0.0
      %1316 = vmatprep.subr.mxu0 0.0
      %1317 = vmatpush1.msra.mxu0 0.0
      %1318 = vmatprep.subr.mxu0 0.0
      %1319 = vmatpush1.msra.mxu0 0.0
      %1320 = vmatprep.subr.mxu0 0.0
      %1321 = vmatpush1.msra.mxu0 0.0
      %1322 = vmatprep.subr.mxu0 0.0
      %1323 = vmatpush1.msra.mxu0 0.0
      %1324 = vmatprep.subr.mxu0 0.0
      %1325 = vmatpush1.msra.mxu0 0.0
      %1326 = vmatprep.subr.mxu0 0.0
      %1327 = vmatpush1.msra.mxu0 0.0
      %1328 = vmatprep.subr.mxu0 0.0
      %1329 = vmatpush1.msra.mxu0 0.0
      %1330 = vmatprep.subr.mxu0 0.0
      %1331 = vmatpush1.msra.mxu0 0.0
      %1332 = vmatprep.subr.mxu0 0.0
      %1333 = vmatpush1.msra.mxu0 0.0
      %1334 = vmatprep.subr.mxu0 0.0
      %1335 = vmatpush1.msra.mxu0 0.0
      %1336 = vmatprep.subr.mxu0 0.0
      %1337 = vmatpush1.msra.mxu0 0.0
      %1338 = vmatprep.subr.mxu0 0.0
      %1339 = vmatpush1.msra.mxu0 0.0
      %1340 = vmatprep.subr.mxu0 0.0
      %1341 = vmatpush1.msra.mxu0 0.0
      %1342 = vmatprep.mubr.f32.mxu0 0.0
      %1343 = vmatmul.mubr.f32.gmra.mrb[0].mxu0 %v1267
      %v1344 = vpop.f32.mrb[0].mxu0
      %v1345 = vadd.f32 0.0, %v1344
      %v1346 = vpop.f32.mrb[0].mxu0
      %1347 = vmatprep.mubr.f32.mxu0 0.0
      %1348 = vmatmul.mubr.f32.gmra.mrb[0].mxu0 %v1270
      %v1349 = vpop.f32.mrb[0].mxu0
      %v1350 = vadd.f32 0.0, %v1349
      %v1351 = vpop.f32.mrb[0].mxu0
      %1352 = vmatprep.mubr.f32.mxu0 0.0
      %1353 = vmatmul.mubr.f32.gmra.mrb[0].mxu0 %v1273
      %v1354 = vpop.f32.mrb[0].mxu0
      %v1355 = vadd.f32 0.0, %v1354
      %v1356 = vpop.f32.mrb[0].mxu0
      %1357 = vmatprep.mubr.f32.mxu0 0.0
      %1358 = vmatmul.mubr.f32.gmra.mrb[0].mxu0 %v1276
      %v1359 = vpop.f32.mrb[0].mxu0
      %v1360 = vadd.f32 0.0, %v1359
      %v1361 = vpop.f32.mrb[0].mxu0
      %1362 = vdwg.mxu0
      %v1363 = vadd.f32 %v1245, %v1345
      %v1364 = vadd.f32 %v1246, %v1350
      %v1365 = vadd.f32 %v1247, %v1355
      %v1366 = vadd.f32 %v1248, %v1360
      %s1367 = scalar_lea.vmem %s2, 160
      %v1368 = vld [vmem:[%s1367] sm:$0xff]
      %v1369 = vld [vmem:[%s1367 + $0x8] sm:$0xff]
      %v1370 = vld [vmem:[%s1367 + $0x10] sm:$0xff]
      %v1371 = vld [vmem:[%s1367 + $0x18] sm:$0xff]
      %1372 = vrot.lane.b32.xlu0 %v793, 117
      %v1373 = vpop.permute.xlu0 %1372
      %1374 = vrot.lane.b32.xlu0 %v794, 117
      %v1375 = vpop.permute.xlu0 %1374
      %1376 = vrot.lane.b32.xlu0 %v795, 117
      %v1377 = vpop.permute.xlu0 %1376
      %1378 = vrot.lane.b32.xlu0 %v796, 117
      %v1379 = vpop.permute.xlu0 %1378
      %v1385 = vsel %vm818, %v1368, 0
      %v1388 = vsel %vm818, %v1369, 0
      %v1391 = vsel %vm818, %v1370, 0
      %v1394 = vsel %vm818, %v1371, 0
      %1396 = vmatprep.subr.mxu0 0.0
      %1397 = vmatpush1.msra.mxu0 %v1373
      %1398 = vmatprep.subr.mxu0 0.0
      %1399 = vmatpush1.msra.mxu0 %v1375
      %1400 = vmatprep.subr.mxu0 0.0
      %1401 = vmatpush1.msra.mxu0 %v1377
      %1402 = vmatprep.subr.mxu0 0.0
      %1403 = vmatpush1.msra.mxu0 %v1379
      %1404 = vmatprep.subr.mxu0 0.0
      %1405 = vmatpush1.msra.mxu0 0.0
      %1406 = vmatprep.subr.mxu0 0.0
      %1407 = vmatpush1.msra.mxu0 0.0
      %1408 = vmatprep.subr.mxu0 0.0
      %1409 = vmatpush1.msra.mxu0 0.0
      %1410 = vmatprep.subr.mxu0 0.0
      %1411 = vmatpush1.msra.mxu0 0.0
      %1412 = vmatprep.subr.mxu0 0.0
      %1413 = vmatpush1.msra.mxu0 0.0
      %1414 = vmatprep.subr.mxu0 0.0
      %1415 = vmatpush1.msra.mxu0 0.0
      %1416 = vmatprep.subr.mxu0 0.0
      %1417 = vmatpush1.msra.mxu0 0.0
      %1418 = vmatprep.subr.mxu0 0.0
      %1419 = vmatpush1.msra.mxu0 0.0
      %1420 = vmatprep.subr.mxu0 0.0
      %1421 = vmatpush1.msra.mxu0 0.0
      %1422 = vmatprep.subr.mxu0 0.0
      %1423 = vmatpush1.msra.mxu0 0.0
      %1424 = vmatprep.subr.mxu0 0.0
      %1425 = vmatpush1.msra.mxu0 0.0
      %1426 = vmatprep.subr.mxu0 0.0
      %1427 = vmatpush1.msra.mxu0 0.0
      %1428 = vmatprep.subr.mxu0 0.0
      %1429 = vmatpush1.msra.mxu0 0.0
      %1430 = vmatprep.subr.mxu0 0.0
      %1431 = vmatpush1.msra.mxu0 0.0
      %1432 = vmatprep.subr.mxu0 0.0
      %1433 = vmatpush1.msra.mxu0 0.0
      %1434 = vmatprep.subr.mxu0 0.0
      %1435 = vmatpush1.msra.mxu0 0.0
      %1436 = vmatprep.subr.mxu0 0.0
      %1437 = vmatpush1.msra.mxu0 0.0
      %1438 = vmatprep.subr.mxu0 0.0
      %1439 = vmatpush1.msra.mxu0 0.0
      %1440 = vmatprep.subr.mxu0 0.0
      %1441 = vmatpush1.msra.mxu0 0.0
      %1442 = vmatprep.subr.mxu0 0.0
      %1443 = vmatpush1.msra.mxu0 0.0
      %1444 = vmatprep.subr.mxu0 0.0
      %1445 = vmatpush1.msra.mxu0 0.0
      %1446 = vmatprep.subr.mxu0 0.0
      %1447 = vmatpush1.msra.mxu0 0.0
      %1448 = vmatprep.subr.mxu0 0.0
      %1449 = vmatpush1.msra.mxu0 0.0
      %1450 = vmatprep.subr.mxu0 0.0
      %1451 = vmatpush1.msra.mxu0 0.0
      %1452 = vmatprep.subr.mxu0 0.0
      %1453 = vmatpush1.msra.mxu0 0.0
      %1454 = vmatprep.subr.mxu0 0.0
      %1455 = vmatpush1.msra.mxu0 0.0
      %1456 = vmatprep.subr.mxu0 0.0
      %1457 = vmatpush1.msra.mxu0 0.0
      %1458 = vmatprep.subr.mxu0 0.0
      %1459 = vmatpush1.msra.mxu0 0.0
      %1460 = vmatprep.mubr.f32.mxu0 0.0
      %1461 = vmatmul.mubr.f32.gmra.mrb[0].mxu0 %v1385
      %v1462 = vpop.f32.mrb[0].mxu0
      %v1463 = vadd.f32 0.0, %v1462
      %v1464 = vpop.f32.mrb[0].mxu0
      %1465 = vmatprep.mubr.f32.mxu0 0.0
      %1466 = vmatmul.mubr.f32.gmra.mrb[0].mxu0 %v1388
      %v1467 = vpop.f32.mrb[0].mxu0
      %v1468 = vadd.f32 0.0, %v1467
      %v1469 = vpop.f32.mrb[0].mxu0
      %1470 = vmatprep.mubr.f32.mxu0 0.0
      %1471 = vmatmul.mubr.f32.gmra.mrb[0].mxu0 %v1391
      %v1472 = vpop.f32.mrb[0].mxu0
      %v1473 = vadd.f32 0.0, %v1472
      %v1474 = vpop.f32.mrb[0].mxu0
      %1475 = vmatprep.mubr.f32.mxu0 0.0
      %1476 = vmatmul.mubr.f32.gmra.mrb[0].mxu0 %v1394
      %v1477 = vpop.f32.mrb[0].mxu0
      %v1478 = vadd.f32 0.0, %v1477
      %v1479 = vpop.f32.mrb[0].mxu0
      %1480 = vdwg.mxu0
      %v1481 = vadd.f32 %v1363, %v1463
      %v1482 = vadd.f32 %v1364, %v1468
      %v1483 = vadd.f32 %v1365, %v1473
      %v1484 = vadd.f32 %v1366, %v1478
      %s1485 = scalar_lea.vmem %s2, 192
      %v1486 = vld [vmem:[%s1485] sm:$0xff]
      %v1487 = vld [vmem:[%s1485 + $0x8] sm:$0xff]
      %v1488 = vld [vmem:[%s1485 + $0x10] sm:$0xff]
      %v1489 = vld [vmem:[%s1485 + $0x18] sm:$0xff]
      %1490 = vrot.lane.b32.xlu0 %v793, 110
      %v1491 = vpop.permute.xlu0 %1490
      %1492 = vrot.lane.b32.xlu0 %v794, 110
      %v1493 = vpop.permute.xlu0 %1492
      %1494 = vrot.lane.b32.xlu0 %v795, 110
      %v1495 = vpop.permute.xlu0 %1494
      %1496 = vrot.lane.b32.xlu0 %v796, 110
      %v1497 = vpop.permute.xlu0 %1496
      %v1503 = vsel %vm818, %v1486, 0
      %v1506 = vsel %vm818, %v1487, 0
      %v1509 = vsel %vm818, %v1488, 0
      %v1512 = vsel %vm818, %v1489, 0
      %1514 = vmatprep.subr.mxu0 0.0
      %1515 = vmatpush1.msra.mxu0 %v1491
      %1516 = vmatprep.subr.mxu0 0.0
      %1517 = vmatpush1.msra.mxu0 %v1493
      %1518 = vmatprep.subr.mxu0 0.0
      %1519 = vmatpush1.msra.mxu0 %v1495
      %1520 = vmatprep.subr.mxu0 0.0
      %1521 = vmatpush1.msra.mxu0 %v1497
      %1522 = vmatprep.subr.mxu0 0.0
      %1523 = vmatpush1.msra.mxu0 0.0
      %1524 = vmatprep.subr.mxu0 0.0
      %1525 = vmatpush1.msra.mxu0 0.0
      %1526 = vmatprep.subr.mxu0 0.0
      %1527 = vmatpush1.msra.mxu0 0.0
      %1528 = vmatprep.subr.mxu0 0.0
      %1529 = vmatpush1.msra.mxu0 0.0
      %1530 = vmatprep.subr.mxu0 0.0
      %1531 = vmatpush1.msra.mxu0 0.0
      %1532 = vmatprep.subr.mxu0 0.0
      %1533 = vmatpush1.msra.mxu0 0.0
      %1534 = vmatprep.subr.mxu0 0.0
      %1535 = vmatpush1.msra.mxu0 0.0
      %1536 = vmatprep.subr.mxu0 0.0
      %1537 = vmatpush1.msra.mxu0 0.0
      %1538 = vmatprep.subr.mxu0 0.0
      %1539 = vmatpush1.msra.mxu0 0.0
      %1540 = vmatprep.subr.mxu0 0.0
      %1541 = vmatpush1.msra.mxu0 0.0
      %1542 = vmatprep.subr.mxu0 0.0
      %1543 = vmatpush1.msra.mxu0 0.0
      %1544 = vmatprep.subr.mxu0 0.0
      %1545 = vmatpush1.msra.mxu0 0.0
      %1546 = vmatprep.subr.mxu0 0.0
      %1547 = vmatpush1.msra.mxu0 0.0
      %1548 = vmatprep.subr.mxu0 0.0
      %1549 = vmatpush1.msra.mxu0 0.0
      %1550 = vmatprep.subr.mxu0 0.0
      %1551 = vmatpush1.msra.mxu0 0.0
      %1552 = vmatprep.subr.mxu0 0.0
      %1553 = vmatpush1.msra.mxu0 0.0
      %1554 = vmatprep.subr.mxu0 0.0
      %1555 = vmatpush1.msra.mxu0 0.0
      %1556 = vmatprep.subr.mxu0 0.0
      %1557 = vmatpush1.msra.mxu0 0.0
      %1558 = vmatprep.subr.mxu0 0.0
      %1559 = vmatpush1.msra.mxu0 0.0
      %1560 = vmatprep.subr.mxu0 0.0
      %1561 = vmatpush1.msra.mxu0 0.0
      %1562 = vmatprep.subr.mxu0 0.0
      %1563 = vmatpush1.msra.mxu0 0.0
      %1564 = vmatprep.subr.mxu0 0.0
      %1565 = vmatpush1.msra.mxu0 0.0
      %1566 = vmatprep.subr.mxu0 0.0
      %1567 = vmatpush1.msra.mxu0 0.0
      %1568 = vmatprep.subr.mxu0 0.0
      %1569 = vmatpush1.msra.mxu0 0.0
      %1570 = vmatprep.subr.mxu0 0.0
      %1571 = vmatpush1.msra.mxu0 0.0
      %1572 = vmatprep.subr.mxu0 0.0
      %1573 = vmatpush1.msra.mxu0 0.0
      %1574 = vmatprep.subr.mxu0 0.0
      %1575 = vmatpush1.msra.mxu0 0.0
      %1576 = vmatprep.subr.mxu0 0.0
      %1577 = vmatpush1.msra.mxu0 0.0
      %1578 = vmatprep.mubr.f32.mxu0 0.0
      %1579 = vmatmul.mubr.f32.gmra.mrb[0].mxu0 %v1503
      %v1580 = vpop.f32.mrb[0].mxu0
      %v1581 = vadd.f32 0.0, %v1580
      %v1582 = vpop.f32.mrb[0].mxu0
      %1583 = vmatprep.mubr.f32.mxu0 0.0
      %1584 = vmatmul.mubr.f32.gmra.mrb[0].mxu0 %v1506
      %v1585 = vpop.f32.mrb[0].mxu0
      %v1586 = vadd.f32 0.0, %v1585
      %v1587 = vpop.f32.mrb[0].mxu0
      %1588 = vmatprep.mubr.f32.mxu0 0.0
      %1589 = vmatmul.mubr.f32.gmra.mrb[0].mxu0 %v1509
      %v1590 = vpop.f32.mrb[0].mxu0
      %v1591 = vadd.f32 0.0, %v1590
      %v1592 = vpop.f32.mrb[0].mxu0
      %1593 = vmatprep.mubr.f32.mxu0 0.0
      %1594 = vmatmul.mubr.f32.gmra.mrb[0].mxu0 %v1512
      %v1595 = vpop.f32.mrb[0].mxu0
      %v1596 = vadd.f32 0.0, %v1595
      %v1597 = vpop.f32.mrb[0].mxu0
      %1598 = vdwg.mxu0
      %v1599 = vadd.f32 %v1481, %v1581
      %v1600 = vadd.f32 %v1482, %v1586
      %v1601 = vadd.f32 %v1483, %v1591
      %v1602 = vadd.f32 %v1484, %v1596
      %s1603 = scalar_lea.vmem %s2, 224
      %v1604 = vld [vmem:[%s1603] sm:$0xff]
      %v1605 = vld [vmem:[%s1603 + $0x8] sm:$0xff]
      %v1606 = vld [vmem:[%s1603 + $0x10] sm:$0xff]
      %v1607 = vld [vmem:[%s1603 + $0x18] sm:$0xff]
      %1608 = vrot.lane.b32.xlu0 %v793, 109
      %v1609 = vpop.permute.xlu0 %1608
      %1610 = vrot.lane.b32.xlu0 %v794, 109
      %v1611 = vpop.permute.xlu0 %1610
      %1612 = vrot.lane.b32.xlu0 %v795, 109
      %v1613 = vpop.permute.xlu0 %1612
      %1614 = vrot.lane.b32.xlu0 %v796, 109
      %v1615 = vpop.permute.xlu0 %1614
      %v1621 = vsel %vm818, %v1604, 0
      %v1624 = vsel %vm818, %v1605, 0
      %v1627 = vsel %vm818, %v1606, 0
      %v1630 = vsel %vm818, %v1607, 0
      %1632 = vmatprep.subr.mxu0 0.0
      %1633 = vmatpush1.msra.mxu0 %v1609
      %1634 = vmatprep.subr.mxu0 0.0
      %1635 = vmatpush1.msra.mxu0 %v1611
      %1636 = vmatprep.subr.mxu0 0.0
      %1637 = vmatpush1.msra.mxu0 %v1613
      %1638 = vmatprep.subr.mxu0 0.0
      %1639 = vmatpush1.msra.mxu0 %v1615
      %1640 = vmatprep.subr.mxu0 0.0
      %1641 = vmatpush1.msra.mxu0 0.0
      %1642 = vmatprep.subr.mxu0 0.0
      %1643 = vmatpush1.msra.mxu0 0.0
      %1644 = vmatprep.subr.mxu0 0.0
      %1645 = vmatpush1.msra.mxu0 0.0
      %1646 = vmatprep.subr.mxu0 0.0
      %1647 = vmatpush1.msra.mxu0 0.0
      %1648 = vmatprep.subr.mxu0 0.0
      %1649 = vmatpush1.msra.mxu0 0.0
      %1650 = vmatprep.subr.mxu0 0.0
      %1651 = vmatpush1.msra.mxu0 0.0
      %1652 = vmatprep.subr.mxu0 0.0
      %1653 = vmatpush1.msra.mxu0 0.0
      %1654 = vmatprep.subr.mxu0 0.0
      %1655 = vmatpush1.msra.mxu0 0.0
      %1656 = vmatprep.subr.mxu0 0.0
      %1657 = vmatpush1.msra.mxu0 0.0
      %1658 = vmatprep.subr.mxu0 0.0
      %1659 = vmatpush1.msra.mxu0 0.0
      %1660 = vmatprep.subr.mxu0 0.0
      %1661 = vmatpush1.msra.mxu0 0.0
      %1662 = vmatprep.subr.mxu0 0.0
      %1663 = vmatpush1.msra.mxu0 0.0
      %1664 = vmatprep.subr.mxu0 0.0
      %1665 = vmatpush1.msra.mxu0 0.0
      %1666 = vmatprep.subr.mxu0 0.0
      %1667 = vmatpush1.msra.mxu0 0.0
      %1668 = vmatprep.subr.mxu0 0.0
      %1669 = vmatpush1.msra.mxu0 0.0
      %1670 = vmatprep.subr.mxu0 0.0
      %1671 = vmatpush1.msra.mxu0 0.0
      %1672 = vmatprep.subr.mxu0 0.0
      %1673 = vmatpush1.msra.mxu0 0.0
      %1674 = vmatprep.subr.mxu0 0.0
      %1675 = vmatpush1.msra.mxu0 0.0
      %1676 = vmatprep.subr.mxu0 0.0
      %1677 = vmatpush1.msra.mxu0 0.0
      %1678 = vmatprep.subr.mxu0 0.0
      %1679 = vmatpush1.msra.mxu0 0.0
      %1680 = vmatprep.subr.mxu0 0.0
      %1681 = vmatpush1.msra.mxu0 0.0
      %1682 = vmatprep.subr.mxu0 0.0
      %1683 = vmatpush1.msra.mxu0 0.0
      %1684 = vmatprep.subr.mxu0 0.0
      %1685 = vmatpush1.msra.mxu0 0.0
      %1686 = vmatprep.subr.mxu0 0.0
      %1687 = vmatpush1.msra.mxu0 0.0
      %1688 = vmatprep.subr.mxu0 0.0
      %1689 = vmatpush1.msra.mxu0 0.0
      %1690 = vmatprep.subr.mxu0 0.0
      %1691 = vmatpush1.msra.mxu0 0.0
      %1692 = vmatprep.subr.mxu0 0.0
      %1693 = vmatpush1.msra.mxu0 0.0
      %1694 = vmatprep.subr.mxu0 0.0
      %1695 = vmatpush1.msra.mxu0 0.0
      %1696 = vmatprep.mubr.f32.mxu0 0.0
      %1697 = vmatmul.mubr.f32.gmra.mrb[0].mxu0 %v1621
      %v1698 = vpop.f32.mrb[0].mxu0
      %v1699 = vadd.f32 0.0, %v1698
      %v1700 = vpop.f32.mrb[0].mxu0
      %1701 = vmatprep.mubr.f32.mxu0 0.0
      %1702 = vmatmul.mubr.f32.gmra.mrb[0].mxu0 %v1624
      %v1703 = vpop.f32.mrb[0].mxu0
      %v1704 = vadd.f32 0.0, %v1703
      %v1705 = vpop.f32.mrb[0].mxu0
      %1706 = vmatprep.mubr.f32.mxu0 0.0
      %1707 = vmatmul.mubr.f32.gmra.mrb[0].mxu0 %v1627
      %v1708 = vpop.f32.mrb[0].mxu0
      %v1709 = vadd.f32 0.0, %v1708
      %v1710 = vpop.f32.mrb[0].mxu0
      %1711 = vmatprep.mubr.f32.mxu0 0.0
      %1712 = vmatmul.mubr.f32.gmra.mrb[0].mxu0 %v1630
      %v1713 = vpop.f32.mrb[0].mxu0
      %v1714 = vadd.f32 0.0, %v1713
      %v1715 = vpop.f32.mrb[0].mxu0
      %1716 = vdwg.mxu0
      %v1717 = vadd.f32 %v1599, %v1699
      %v1718 = vadd.f32 %v1600, %v1704
      %v1719 = vadd.f32 %v1601, %v1709
      %v1720 = vadd.f32 %v1602, %v1714
      %s1721 = scalar_lea.vmem %s2, 256
      %v1722 = vld [vmem:[%s1721] sm:$0xff]
      %v1723 = vld [vmem:[%s1721 + $0x8] sm:$0xff]
      %v1724 = vld [vmem:[%s1721 + $0x10] sm:$0xff]
      %v1725 = vld [vmem:[%s1721 + $0x18] sm:$0xff]
      %1726 = vrot.lane.b32.xlu0 %v793, 108
      %v1727 = vpop.permute.xlu0 %1726
      %1728 = vrot.lane.b32.xlu0 %v794, 108
      %v1729 = vpop.permute.xlu0 %1728
      %1730 = vrot.lane.b32.xlu0 %v795, 108
      %v1731 = vpop.permute.xlu0 %1730
      %1732 = vrot.lane.b32.xlu0 %v796, 108
      %v1733 = vpop.permute.xlu0 %1732
      %v1739 = vsel %vm818, %v1722, 0
      %v1742 = vsel %vm818, %v1723, 0
      %v1745 = vsel %vm818, %v1724, 0
      %v1748 = vsel %vm818, %v1725, 0
      %1750 = vmatprep.subr.mxu0 0.0
      %1751 = vmatpush1.msra.mxu0 %v1727
      %1752 = vmatprep.subr.mxu0 0.0
      %1753 = vmatpush1.msra.mxu0 %v1729
      %1754 = vmatprep.subr.mxu0 0.0
      %1755 = vmatpush1.msra.mxu0 %v1731
      %1756 = vmatprep.subr.mxu0 0.0
      %1757 = vmatpush1.msra.mxu0 %v1733
      %1758 = vmatprep.subr.mxu0 0.0
      %1759 = vmatpush1.msra.mxu0 0.0
      %1760 = vmatprep.subr.mxu0 0.0
      %1761 = vmatpush1.msra.mxu0 0.0
      %1762 = vmatprep.subr.mxu0 0.0
      %1763 = vmatpush1.msra.mxu0 0.0
      %1764 = vmatprep.subr.mxu0 0.0
      %1765 = vmatpush1.msra.mxu0 0.0
      %1766 = vmatprep.subr.mxu0 0.0
      %1767 = vmatpush1.msra.mxu0 0.0
      %1768 = vmatprep.subr.mxu0 0.0
      %1769 = vmatpush1.msra.mxu0 0.0
      %1770 = vmatprep.subr.mxu0 0.0
      %1771 = vmatpush1.msra.mxu0 0.0
      %1772 = vmatprep.subr.mxu0 0.0
      %1773 = vmatpush1.msra.mxu0 0.0
      %1774 = vmatprep.subr.mxu0 0.0
      %1775 = vmatpush1.msra.mxu0 0.0
      %1776 = vmatprep.subr.mxu0 0.0
      %1777 = vmatpush1.msra.mxu0 0.0
      %1778 = vmatprep.subr.mxu0 0.0
      %1779 = vmatpush1.msra.mxu0 0.0
      %1780 = vmatprep.subr.mxu0 0.0
      %1781 = vmatpush1.msra.mxu0 0.0
      %1782 = vmatprep.subr.mxu0 0.0
      %1783 = vmatpush1.msra.mxu0 0.0
      %1784 = vmatprep.subr.mxu0 0.0
      %1785 = vmatpush1.msra.mxu0 0.0
      %1786 = vmatprep.subr.mxu0 0.0
      %1787 = vmatpush1.msra.mxu0 0.0
      %1788 = vmatprep.subr.mxu0 0.0
      %1789 = vmatpush1.msra.mxu0 0.0
      %1790 = vmatprep.subr.mxu0 0.0
      %1791 = vmatpush1.msra.mxu0 0.0
      %1792 = vmatprep.subr.mxu0 0.0
      %1793 = vmatpush1.msra.mxu0 0.0
      %1794 = vmatprep.subr.mxu0 0.0
      %1795 = vmatpush1.msra.mxu0 0.0
      %1796 = vmatprep.subr.mxu0 0.0
      %1797 = vmatpush1.msra.mxu0 0.0
      %1798 = vmatprep.subr.mxu0 0.0
      %1799 = vmatpush1.msra.mxu0 0.0
      %1800 = vmatprep.subr.mxu0 0.0
      %1801 = vmatpush1.msra.mxu0 0.0
      %1802 = vmatprep.subr.mxu0 0.0
      %1803 = vmatpush1.msra.mxu0 0.0
      %1804 = vmatprep.subr.mxu0 0.0
      %1805 = vmatpush1.msra.mxu0 0.0
      %1806 = vmatprep.subr.mxu0 0.0
      %1807 = vmatpush1.msra.mxu0 0.0
      %1808 = vmatprep.subr.mxu0 0.0
      %1809 = vmatpush1.msra.mxu0 0.0
      %1810 = vmatprep.subr.mxu0 0.0
      %1811 = vmatpush1.msra.mxu0 0.0
      %1812 = vmatprep.subr.mxu0 0.0
      %1813 = vmatpush1.msra.mxu0 0.0
      %1814 = vmatprep.mubr.f32.mxu0 0.0
      %1815 = vmatmul.mubr.f32.gmra.mrb[0].mxu0 %v1739
      %v1816 = vpop.f32.mrb[0].mxu0
      %v1817 = vadd.f32 0.0, %v1816
      %v1818 = vpop.f32.mrb[0].mxu0
      %1819 = vmatprep.mubr.f32.mxu0 0.0
      %1820 = vmatmul.mubr.f32.gmra.mrb[0].mxu0 %v1742
      %v1821 = vpop.f32.mrb[0].mxu0
      %v1822 = vadd.f32 0.0, %v1821
      %v1823 = vpop.f32.mrb[0].mxu0
      %1824 = vmatprep.mubr.f32.mxu0 0.0
      %1825 = vmatmul.mubr.f32.gmra.mrb[0].mxu0 %v1745
      %v1826 = vpop.f32.mrb[0].mxu0
      %v1827 = vadd.f32 0.0, %v1826
      %v1828 = vpop.f32.mrb[0].mxu0
      %1829 = vmatprep.mubr.f32.mxu0 0.0
      %1830 = vmatmul.mubr.f32.gmra.mrb[0].mxu0 %v1748
      %v1831 = vpop.f32.mrb[0].mxu0
      %v1832 = vadd.f32 0.0, %v1831
      %v1833 = vpop.f32.mrb[0].mxu0
      %1834 = vdwg.mxu0
      %v1835 = vadd.f32 %v1717, %v1817
      %v1836 = vadd.f32 %v1718, %v1822
      %v1837 = vadd.f32 %v1719, %v1827
      %v1838 = vadd.f32 %v1720, %v1832
      %vm1839 = vcmp.ge.f32.partialorder %v1835, 0.0
      %vm1840 = vcmp.ge.f32.partialorder %v1836, 0.0
      %vm1841 = vcmp.ge.f32.partialorder %v1837, 0.0
      %vm1842 = vcmp.ge.f32.partialorder %v1838, 0.0
      %v1843 = vmul.f32 %v1835, 0.2
      %v1844 = vmul.f32 %v1836, 0.2
      %v1845 = vmul.f32 %v1837, 0.2
      %v1846 = vmul.f32 %v1838, 0.2
      %v1847 = vsel %vm1839, %v1835, %v1843
      %v1848 = vsel %vm1840, %v1836, %v1844
      %v1849 = vsel %vm1841, %v1837, %v1845
      %v1850 = vsel %vm1842, %v1838, %v1846
      %v1851 = vadd.f32 %v1847, %v760
      %v1852 = vadd.f32 %v1848, %v761
      %v1853 = vadd.f32 %v1849, %v762
      %v1854 = vadd.f32 %v1850, %v763
      %vm1855 = vcmask 662528
      %1856 = vst.msk [vmem:[%s197] sm:$0xff] %vm1855, %v1851
      %1857 = vst.msk [vmem:[%s197 + $0x8] sm:$0xff] %vm1855, %v1852
      %1858 = vst.msk [vmem:[%s197 + $0x10] sm:$0xff] %vm1855, %v1853
      %1859 = vst.msk [vmem:[%s197 + $0x18] sm:$0xff] %vm1855, %v1854
      %p1860 = scmp.lt.s32.totalorder %s15, 1
      %s1861 = scalar_select %p1860, %s15, 1
      %s1862 = smul.addr %s1861, 4
      %s1863 = smul.addr %s1862, 8
      %s1864 = scalar_lea.vmem %s4, %s1863
      // Predicated region
      $region37: #{double_conv2d_forward.1} parent=35 // pred_check
        %p1865 = pneg %p122
      $region38: #{double_conv2d_forward.1} parent=35 // pred_check_branch
        %1867 = sbr.rel (%p1865) target = $region40
      $region39: #{double_conv2d_forward.1} parent=35 // pred_region
        _
      $region40: #{double_conv2d_forward.1} parent=35 // pred_fallthru
        _
    $region36: #{double_conv2d_forward.1} parent=5 // pred_fallthru
      _
    %p1868 = scmp.le.s32.totalorder 2, %s10
    // Predicated region
    $region41: #{double_conv2d_forward.1} parent=5 // pred_check
      %p1869 = pneg %p1868
    $region42: #{double_conv2d_forward.1} parent=5 // pred_check_branch
      %1871 = sbr.rel (%p1869) target = $region44
    $region43: #{double_conv2d_forward.1} parent=5 // pred_region
      %s1872 = ssub.s32 %s10, 2
      // Predicated region
      $region45: #{double_conv2d_forward.1} parent=43 // pred_check
        %p1873 = pneg %p128
      $region46: #{double_conv2d_forward.1} parent=43 // pred_check_branch
        %1875 = sbr.rel (%p1873) target = $region48
      $region47: #{double_conv2d_forward.1} parent=43 // pred_region
        %p1876 = scmp.lt.s32.totalorder %s16, 1
        %s1877 = scalar_select %p1876, %s16, 1
        %s1878 = smul.addr %s1877, 4
        %s1879 = smul.addr %s1878, 8
        %s1880 = scalar_lea.vmem %s4, %s1879
      $region48: #{double_conv2d_forward.1} parent=43 // pred_fallthru
        _
    $region44: #{double_conv2d_forward.1} parent=5 // pred_fallthru
      _
  $region6: #{double_conv2d_forward.1} parent=0 // loop_footer
    %s14 = sadd.s32 1, %s10
  $region7: #{double_conv2d_forward.1} parent=0 // loop_footer_branch
    %9 = sbr.rel target = $region3
  $region8: #{double_conv2d_forward.1} parent=0 // loop_exit
    _

</llo_original>
